<compile_context>
chip_gen: v7x
topology: tpu7x:2x2x1
jax: 0.10.0
libtpu: 0.0.40
codegen_flags: <defaults>
</compile_context>

<pallas_src>
import jax
import jax.numpy as jnp
from jax import lax
from jax.experimental import pallas as pl
from jax.experimental.pallas import tpu as pltpu

EPS = 1e-5  # eps used by both nn.BatchNorm1d and nn.LayerNorm defaults

# --- packed weight slab layout: [224, 64] f32, row offsets sublane-aligned ---
_W1, _W2, _W3, _W4T, _CW1, _CW2, _CW3 = 0, 8, 40, 104, 112, 176, 208
W_ROWS, W_LANES = 224, 64
# --- packed row-vector slab layout: [24, 128] f32, one parameter per row -----
(_B1, _G1, _BE1, _B2, _G2, _BE2, _B3, _G3, _BE3, _B4,
 _CB1, _CG1, _CBE1, _CB2, _CG2, _CBE2, _CB3) = range(17)
R_ROWS, R_LANES = 24, 128


# ---------------------------------------------------------------------------
# Single fused forward kernel (one grid step == one graph)
# ---------------------------------------------------------------------------
def ac_gcn_kernel(a_ref, x_ref, mn_ref, mc_ref, w_ref, r_ref, out_ref):
    n = a_ref.shape[0]
    a = a_ref[...]                                   # [N, N] normalized adjacency
    # (1/N) * ones row: moves node-axis reductions onto the MXU.
    ones_mean = jnp.full((1, n), 1.0 / n, dtype=jnp.float32)

    def bn(h, g, b):                                 # BatchNorm1d, training mode
        mu = jnp.dot(ones_mean, h, preferred_element_type=jnp.float32)
        c = h - mu
        var = jnp.dot(ones_mean, c * c, preferred_element_type=jnp.float32)
        return c * lax.rsqrt(var + EPS) * g + b

    def ln(z, g, b):                                 # LayerNorm over lanes
        mu = jnp.mean(z, axis=-1, keepdims=True)
        var = jnp.mean((z - mu) ** 2, axis=-1, keepdims=True)
        return (z - mu) * lax.rsqrt(var + EPS) * g + b

    def elu(h):                                      # exp arg clamped <= 0
        return jnp.where(h > 0, h, jnp.exp(jnp.minimum(h, 0.0)) - 1.0)

    # ---- unpack parameter slabs with static slices (no DMA, no runtime cost)
    w1 = w_ref[_W1:_W1 + 4, 0:32]
    w2 = w_ref[_W2:_W2 + 32, 0:64]
    w3 = w_ref[_W3:_W3 + 64, 0:32]
    w4t = w_ref[_W4T:_W4T + 1, 0:32]
    cw1 = w_ref[_CW1:_CW1 + 64, 0:32]
    cw2 = w_ref[_CW2:_CW2 + 32, 0:16]
    cw3 = w_ref[_CW3:_CW3 + 16, 0:1]

    b1 = r_ref[_B1:_B1 + 1, 0:32]
    g1 = r_ref[_G1:_G1 + 1, 0:32]
    be1 = r_ref[_BE1:_BE1 + 1, 0:32]
    b2 = r_ref[_B2:_B2 + 1, 0:64]
    g2 = r_ref[_G2:_G2 + 1, 0:64]
    be2 = r_ref[_BE2:_BE2 + 1, 0:64]
    b3 = r_ref[_B3:_B3 + 1, 0:32]
    g3 = r_ref[_G3:_G3 + 1, 0:32]
    be3 = r_ref[_BE3:_BE3 + 1, 0:32]
    b4 = r_ref[_B4:_B4 + 1, 0:1]
    cb1 = r_ref[_CB1:_CB1 + 1, 0:32]
    cg1 = r_ref[_CG1:_CG1 + 1, 0:32]
    cbe1 = r_ref[_CBE1:_CBE1 + 1, 0:32]
    cb2 = r_ref[_CB2:_CB2 + 1, 0:16]
    cg2 = r_ref[_CG2:_CG2 + 1, 0:16]
    cbe2 = r_ref[_CBE2:_CBE2 + 1, 0:16]
    cb3 = r_ref[_CB3:_CB3 + 1, 0:1]

    m1 = mn_ref[:, 0:32]        # dropout masks already carry the 1/(1-p)=2 scale
    m2 = mn_ref[:, 32:96]
    cm1 = mc_ref[:, 0:32]
    cm2 = mc_ref[:, 32:48]

    # ---- conv1 -> BatchNorm1 -> ELU -> dropout -----------------------------
    h = jnp.dot(a, jnp.dot(x_ref[...], w1, preferred_element_type=jnp.float32),
                preferred_element_type=jnp.float32) + b1
    h = elu(bn(h, g1, be1)) * m1

    # ---- conv2 -> BatchNorm2 -> ELU -> dropout -----------------------------
    h = jnp.dot(a, jnp.dot(h, w2, preferred_element_type=jnp.float32),
                preferred_element_type=jnp.float32) + b2
    h = elu(bn(h, g2, be2)) * m2                     # [N, 64]

    # ---- actor branch: conv4(Norm3(conv3(h))) as a lane-dense [1, N] row ----
    h3 = jnp.dot(a, jnp.dot(h, w3, preferred_element_type=jnp.float32),
                 preferred_element_type=jnp.float32) + b3
    h3 = bn(h3, g3, be3)                             # [N, 32]
    ah3 = jnp.dot(a, h3, preferred_element_type=jnp.float32)       # [N, 32]
    # conv4 computed transposed via dot_general (contract trailing axes):
    # [1,32] x [N,32] -> [1, N]  (no XLU transpose of the [N,32] tile)
    actor = lax.dot_general(w4t, ah3, (((1,), (1,)), ((), ())),
                            preferred_element_type=jnp.float32) + b4

    logits = jnp.tanh(actor)                         # [1, N]
    mx = jnp.max(logits, axis=-1, keepdims=True)
    sh = logits - mx
    e = jnp.exp(sh)
    s = jnp.sum(e, axis=-1, keepdims=True)
    prob = e / s                                     # exact divide (one scalar)
    logp = sh - jnp.log(s)

    # ---- critic: global_mean_pool + MLP ------------------------------------
    pooled = jnp.dot(ones_mean, h, preferred_element_type=jnp.float32)  # [1, 64]

    z = jnp.dot(pooled, cw1, preferred_element_type=jnp.float32) + cb1
    z = jnp.maximum(ln(z, cg1, cbe1) * cm1, 0.0)
    z = jnp.dot(z, cw2, preferred_element_type=jnp.float32) + cb2
    z = jnp.maximum(ln(z, cg2, cbe2) * cm2, 0.0)
    value = jnp.dot(z, cw3, preferred_element_type=jnp.float32) + cb3   # [1, 1]

    # ---- single consolidated output block [3, N] ----------------------------
    out_ref[0:1, :] = prob.astype(out_ref.dtype)
    out_ref[1:2, :] = logp.astype(out_ref.dtype)
    out_ref[2:3, :] = jnp.broadcast_to(value, (1, n)).astype(out_ref.dtype)


# ---------------------------------------------------------------------------
# Host-side packing + wrapper
# ---------------------------------------------------------------------------
def pack_params(params):
    w = jnp.zeros((W_ROWS, W_LANES), jnp.float32)
    w = w.at[_W1:_W1 + 4, 0:32].set(params['w1'])
    w = w.at[_W2:_W2 + 32, 0:64].set(params['w2'])
    w = w.at[_W3:_W3 + 64, 0:32].set(params['w3'])
    w = w.at[_W4T:_W4T + 1, 0:32].set(params['w4t'])
    w = w.at[_CW1:_CW1 + 64, 0:32].set(params['cw1'])
    w = w.at[_CW2:_CW2 + 32, 0:16].set(params['cw2'])
    w = w.at[_CW3:_CW3 + 16, 0:1].set(params['cw3'])

    r = jnp.zeros((R_ROWS, R_LANES), jnp.float32)
    rows = [('b1', _B1, 32), ('g1', _G1, 32), ('be1', _BE1, 32),
            ('b2', _B2, 64), ('g2', _G2, 64), ('be2', _BE2, 64),
            ('b3', _B3, 32), ('g3', _G3, 32), ('be3', _BE3, 32),
            ('b4', _B4, 1),
            ('cb1', _CB1, 32), ('cg1', _CG1, 32), ('cbe1', _CBE1, 32),
            ('cb2', _CB2, 16), ('cg2', _CG2, 16), ('cbe2', _CBE2, 16),
            ('cb3', _CB3, 1)]
    for name, row, width in rows:
        r = r.at[row:row + 1, 0:width].set(params[name])
    return w, r


def pack_masks(masks):
    mn = jnp.concatenate([masks['m1'], masks['m2']], axis=-1)    # [B, N, 96]
    mc = jnp.concatenate([masks['cm1'], masks['cm2']], axis=-1)  # [B, 1, 48]
    return mn, mc


def ac_gcn_forward(x, a_hat, wslab, rslab, mn, mc):
    """Fused batched AC_GCN forward.

    Returns (prob [B,N], value [B,1], log_prob [B,N]); B=1 reproduces the
    PyTorch module's (1,N)/(1,1)/(1,N) outputs for a single graph.
    """
    bsz, n, c_in = x.shape
    out = pl.pallas_call(
        ac_gcn_kernel,
        out_shape=jax.ShapeDtypeStruct((bsz, 3, n), jnp.float32),
        grid=(bsz,),
        in_specs=[
            pl.BlockSpec((None, n, n), lambda b: (b, 0, 0)),      # a_hat
            pl.BlockSpec((None, n, c_in), lambda b: (b, 0, 0)),   # x
            pl.BlockSpec((None, n, 96), lambda b: (b, 0, 0)),     # trunk masks
            pl.BlockSpec((None, 1, 48), lambda b: (b, 0, 0)),     # critic masks
            pl.BlockSpec((W_ROWS, W_LANES), lambda b: (0, 0)),    # weight slab (shared)
            pl.BlockSpec((R_ROWS, R_LANES), lambda b: (0, 0)),    # row-param slab (shared)
        ],
        out_specs=pl.BlockSpec((None, 3, n), lambda b: (b, 0, 0)),
        compiler_params=pltpu.CompilerParams(
            dimension_semantics=("parallel",)),                   # megacore batch split
    )(a_hat, x, mn, mc, wslab, rslab)
    prob = out[:, 0, :]
    log_prob = out[:, 1, :]
    value = out[:, 2, 0:1]
    return prob, value, log_prob


# ---------------------------------------------------------------------------
# Pure-JAX single-graph reference (same math, same dropout masks)
# ---------------------------------------------------------------------------
def ac_gcn_ref(x, a_hat, params, m1, m2, cm1, cm2):
    def bn(h, g, b):
        mu = jnp.mean(h, axis=0, keepdims=True)
        var = jnp.mean((h - mu) ** 2, axis=0, keepdims=True)
        return (h - mu) * lax.rsqrt(var + EPS) * g + b

    def ln(z, g, b):
        mu = jnp.mean(z, axis=-1, keepdims=True)
        var = jnp.mean((z - mu) ** 2, axis=-1, keepdims=True)
        return (z - mu) * lax.rsqrt(var + EPS) * g + b

    def elu(h):
        return jnp.where(h > 0, h, jnp.exp(jnp.minimum(h, 0.0)) - 1.0)

    h = a_hat @ (x @ params['w1']) + params['b1']
    h = elu(bn(h, params['g1'], params['be1'])) * m1
    h = a_hat @ (h @ params['w2']) + params['b2']
    h = elu(bn(h, params['g2'], params['be2'])) * m2

    h3 = a_hat @ (h @ params['w3']) + params['b3']
    h3 = bn(h3, params['g3'], params['be3'])
    actor = a_hat @ (h3 @ params['w4t'].T) + params['b4']   # [N, 1]
    logits = jnp.tanh(actor).reshape(1, -1)
    prob = jax.nn.softmax(logits, axis=-1)
    log_prob = jax.nn.log_softmax(logits, axis=-1)

    pooled = jnp.mean(h, axis=0, keepdims=True)
    z = pooled @ params['cw1'] + params['cb1']
    z = jnp.maximum(ln(z, params['cg1'], params['cbe1']) * cm1, 0.0)
    z = z @ params['cw2'] + params['cb2']
    z = jnp.maximum(ln(z, params['cg2'], params['cbe2']) * cm2, 0.0)
    value = z @ params['cw3'] + params['cb3']
    return prob, value, log_prob


# ---------------------------------------------------------------------------
# Deterministic parameter / input construction
# ---------------------------------------------------------------------------
def _init_linear(key, cin, cout, scale=0.1):
    kw, kb = jax.random.split(key)
    w = scale * jax.random.normal(kw, (cin, cout), jnp.float32)
    b = scale * jax.random.normal(kb, (1, cout), jnp.float32)
    return w, b


if __name__ == "__main__":
    key = jax.random.PRNGKey(0)
    keys = jax.random.split(key, 16)

    B, N, C_IN = 4, 16, 4   # 4 graphs per call, 16 nodes, 4 input features

    # node features (data.x), one feature matrix per graph
    x = jax.random.normal(keys[0], (B, N, C_IN), jnp.float32)

    # data.edge_index: deterministic undirected ring (stride b+1 per graph)
    # -> dense GCN-normalized adjacency Ahat = D^-1/2 (A + I) D^-1/2
    a_list = []
    src = jnp.arange(N)
    for b in range(B):
        dst = (src + 1 + b) % N
        A = jnp.zeros((N, N), jnp.float32)
        A = A.at[src, dst].set(1.0).at[dst, src].set(1.0)
        A = A + jnp.eye(N, dtype=jnp.float32)            # add self loops
        dinv = 1.0 / jnp.sqrt(jnp.sum(A, axis=1))
        a_list.append(A * dinv[:, None] * dinv[None, :])
    a_hat = jnp.stack(a_list, axis=0)                    # [B, N, N]

    params = {}
    params['w1'], params['b1'] = _init_linear(keys[1], 4, 32)
    params['g1'], params['be1'] = jnp.ones((1, 32), jnp.float32), jnp.zeros((1, 32), jnp.float32)
    params['w2'], params['b2'] = _init_linear(keys[2], 32, 64)
    params['g2'], params['be2'] = jnp.ones((1, 64), jnp.float32), jnp.zeros((1, 64), jnp.float32)
    params['w3'], params['b3'] = _init_linear(keys[3], 64, 32)
    params['g3'], params['be3'] = jnp.ones((1, 32), jnp.float32), jnp.zeros((1, 32), jnp.float32)
    # conv4 weight stored pre-transposed [1, 32] so the actor row is lane-dense
    w4, b4 = _init_linear(keys[4], 32, 1)
    params['w4t'], params['b4'] = w4.T, b4
    params['cw1'], params['cb1'] = _init_linear(keys[5], 64, 32)
    params['cg1'], params['cbe1'] = jnp.ones((1, 32), jnp.float32), jnp.zeros((1, 32), jnp.float32)
    params['cw2'], params['cb2'] = _init_linear(keys[6], 32, 16)
    params['cg2'], params['cbe2'] = jnp.ones((1, 16), jnp.float32), jnp.zeros((1, 16), jnp.float32)
    params['cw3'], params['cb3'] = _init_linear(keys[7], 16, 1)

    # Dropout (p=0.5, training=True): deterministic per-graph masks sampled
    # host-side with the 1/(1-p)=2 inverted-dropout scale folded in ({0, 2}).
    masks = {
        'm1': jax.random.bernoulli(keys[8], 0.5, (B, N, 32)).astype(jnp.float32) * 2.0,
        'm2': jax.random.bernoulli(keys[9], 0.5, (B, N, 64)).astype(jnp.float32) * 2.0,
        'cm1': jax.random.bernoulli(keys[10], 0.5, (B, 1, 32)).astype(jnp.float32) * 2.0,
        'cm2': jax.random.bernoulli(keys[11], 0.5, (B, 1, 16)).astype(jnp.float32) * 2.0,
    }

    wslab, rslab = pack_params(params)
    mn, mc = pack_masks(masks)

    prob, value, log_prob = jax.jit(ac_gcn_forward)(x, a_hat, wslab, rslab, mn, mc)
    jax.block_until_ready((prob, value, log_prob))

    # sanity checks
    assert prob.shape == (B, N) and log_prob.shape == (B, N) and value.shape == (B, 1)
    assert jnp.isfinite(prob).all() and jnp.isfinite(value).all() and jnp.isfinite(log_prob).all()
    assert jnp.max(jnp.abs(jnp.sum(prob, axis=-1) - 1.0)) < 1e-4

    # correctness vs. pure-JAX reference (same masks, same math), per graph
    for b in range(B):
        p_ref, v_ref, lp_ref = jax.jit(ac_gcn_ref)(
            x[b], a_hat[b], params,
            masks['m1'][b], masks['m2'][b], masks['cm1'][b], masks['cm2'][b])
        assert jnp.allclose(prob[b:b + 1], p_ref, atol=2e-2, rtol=2e-2)
        assert jnp.allclose(value[b:b + 1], v_ref, atol=2e-2, rtol=2e-2)
        assert jnp.allclose(log_prob[b:b + 1], lp_ref, atol=2e-2, rtol=2e-2)

    # TODO(synk): get_batch_p_v threading / Categorical entropy bookkeeping and
    # BatchNorm running-stat updates are host-side training logic, not kernels,
    # and are intentionally not translated.
    print("KERNEL_OK")
</pallas_src>

<mosaic_0001>
module attributes {stable_mosaic.version = 11 : i64} {
  func.func @ac_gcn_kernel(%arg0: i32, %arg1: memref<1x16x16xf32, #tpu.memory_space<vmem>>, %arg2: memref<1x16x4xf32, #tpu.memory_space<vmem>>, %arg3: memref<1x16x96xf32, #tpu.memory_space<vmem>>, %arg4: memref<1x1x48xf32, #tpu.memory_space<vmem>>, %arg5: memref<224x64xf32, #tpu.memory_space<vmem>>, %arg6: memref<24x128xf32, #tpu.memory_space<vmem>>, %arg7: memref<1x3x16xf32, #tpu.memory_space<vmem>>) attributes {dimension_semantics = [#tpu.dimension_semantics<parallel>], iteration_bounds = array<i64: 4>, scalar_prefetch = 0 : i64, scratch_operands = 0 : i64, tpu.core_type = #tpu.core_type<tc>, window_params = [{transform_indices = @transform_0, window_bounds = array<i64: 1, 16, 16>}, {transform_indices = @transform_1, window_bounds = array<i64: 1, 16, 4>}, {transform_indices = @transform_2, window_bounds = array<i64: 1, 16, 96>}, {transform_indices = @transform_3, window_bounds = array<i64: 1, 1, 48>}, {pipeline_mode = #tpu.pipeline_mode<synchronous>, transform_indices = @transform_4, window_bounds = array<i64: 224, 64>}, {pipeline_mode = #tpu.pipeline_mode<synchronous>, transform_indices = @transform_5, window_bounds = array<i64: 24, 128>}, {transform_indices = @transform_6, window_bounds = array<i64: 1, 3, 16>}]} {
    %c0 = arith.constant 0 : index
    %c0_0 = arith.constant 0 : index
    %c0_1 = arith.constant 0 : index
    %0 = vector.load %arg1[%c0, %c0_0, %c0_1] : memref<1x16x16xf32, #tpu.memory_space<vmem>>, vector<1x16x16xf32>
    %1 = vector.shape_cast %0 : vector<1x16x16xf32> to vector<16x16xf32>
    %cst = arith.constant 6.250000e-02 : f32
    %2 = vector.broadcast %cst : f32 to vector<1x16xf32>
    %c0_2 = arith.constant 0 : index
    %c0_3 = arith.constant 0 : index
    %3 = vector.load %arg5[%c0_2, %c0_3] : memref<224x64xf32, #tpu.memory_space<vmem>>, vector<4x32xf32>
    %c8 = arith.constant 8 : index
    %c0_4 = arith.constant 0 : index
    %4 = vector.load %arg5[%c8, %c0_4] : memref<224x64xf32, #tpu.memory_space<vmem>>, vector<32x64xf32>
    %c40 = arith.constant 40 : index
    %c0_5 = arith.constant 0 : index
    %5 = vector.load %arg5[%c40, %c0_5] : memref<224x64xf32, #tpu.memory_space<vmem>>, vector<64x32xf32>
    %c104 = arith.constant 104 : index
    %c0_6 = arith.constant 0 : index
    %6 = vector.load %arg5[%c104, %c0_6] : memref<224x64xf32, #tpu.memory_space<vmem>>, vector<1x32xf32>
    %c112 = arith.constant 112 : index
    %c0_7 = arith.constant 0 : index
    %7 = vector.load %arg5[%c112, %c0_7] : memref<224x64xf32, #tpu.memory_space<vmem>>, vector<64x32xf32>
    %c176 = arith.constant 176 : index
    %c0_8 = arith.constant 0 : index
    %8 = vector.load %arg5[%c176, %c0_8] : memref<224x64xf32, #tpu.memory_space<vmem>>, vector<32x16xf32>
    %c208 = arith.constant 208 : index
    %c0_9 = arith.constant 0 : index
    %9 = vector.load %arg5[%c208, %c0_9] : memref<224x64xf32, #tpu.memory_space<vmem>>, vector<16x1xf32>
    %c0_10 = arith.constant 0 : index
    %c0_11 = arith.constant 0 : index
    %10 = vector.load %arg6[%c0_10, %c0_11] : memref<24x128xf32, #tpu.memory_space<vmem>>, vector<1x32xf32>
    %c1 = arith.constant 1 : index
    %c0_12 = arith.constant 0 : index
    %11 = vector.load %arg6[%c1, %c0_12] : memref<24x128xf32, #tpu.memory_space<vmem>>, vector<1x32xf32>
    %c2 = arith.constant 2 : index
    %c0_13 = arith.constant 0 : index
    %12 = vector.load %arg6[%c2, %c0_13] : memref<24x128xf32, #tpu.memory_space<vmem>>, vector<1x32xf32>
    %c3 = arith.constant 3 : index
    %c0_14 = arith.constant 0 : index
    %13 = vector.load %arg6[%c3, %c0_14] : memref<24x128xf32, #tpu.memory_space<vmem>>, vector<1x64xf32>
    %c4 = arith.constant 4 : index
    %c0_15 = arith.constant 0 : index
    %14 = vector.load %arg6[%c4, %c0_15] : memref<24x128xf32, #tpu.memory_space<vmem>>, vector<1x64xf32>
    %c5 = arith.constant 5 : index
    %c0_16 = arith.constant 0 : index
    %15 = vector.load %arg6[%c5, %c0_16] : memref<24x128xf32, #tpu.memory_space<vmem>>, vector<1x64xf32>
    %c6 = arith.constant 6 : index
    %c0_17 = arith.constant 0 : index
    %16 = vector.load %arg6[%c6, %c0_17] : memref<24x128xf32, #tpu.memory_space<vmem>>, vector<1x32xf32>
    %c7 = arith.constant 7 : index
    %c0_18 = arith.constant 0 : index
    %17 = vector.load %arg6[%c7, %c0_18] : memref<24x128xf32, #tpu.memory_space<vmem>>, vector<1x32xf32>
    %c8_19 = arith.constant 8 : index
    %c0_20 = arith.constant 0 : index
    %18 = vector.load %arg6[%c8_19, %c0_20] : memref<24x128xf32, #tpu.memory_space<vmem>>, vector<1x32xf32>
    %c9 = arith.constant 9 : index
    %c0_21 = arith.constant 0 : index
    %19 = vector.load %arg6[%c9, %c0_21] : memref<24x128xf32, #tpu.memory_space<vmem>>, vector<1x1xf32>
    %c10 = arith.constant 10 : index
    %c0_22 = arith.constant 0 : index
    %20 = vector.load %arg6[%c10, %c0_22] : memref<24x128xf32, #tpu.memory_space<vmem>>, vector<1x32xf32>
    %c11 = arith.constant 11 : index
    %c0_23 = arith.constant 0 : index
    %21 = vector.load %arg6[%c11, %c0_23] : memref<24x128xf32, #tpu.memory_space<vmem>>, vector<1x32xf32>
    %c12 = arith.constant 12 : index
    %c0_24 = arith.constant 0 : index
    %22 = vector.load %arg6[%c12, %c0_24] : memref<24x128xf32, #tpu.memory_space<vmem>>, vector<1x32xf32>
    %c13 = arith.constant 13 : index
    %c0_25 = arith.constant 0 : index
    %23 = vector.load %arg6[%c13, %c0_25] : memref<24x128xf32, #tpu.memory_space<vmem>>, vector<1x16xf32>
    %c14 = arith.constant 14 : index
    %c0_26 = arith.constant 0 : index
    %24 = vector.load %arg6[%c14, %c0_26] : memref<24x128xf32, #tpu.memory_space<vmem>>, vector<1x16xf32>
    %c15 = arith.constant 15 : index
    %c0_27 = arith.constant 0 : index
    %25 = vector.load %arg6[%c15, %c0_27] : memref<24x128xf32, #tpu.memory_space<vmem>>, vector<1x16xf32>
    %c16 = arith.constant 16 : index
    %c0_28 = arith.constant 0 : index
    %26 = vector.load %arg6[%c16, %c0_28] : memref<24x128xf32, #tpu.memory_space<vmem>>, vector<1x1xf32>
    %c0_29 = arith.constant 0 : index
    %c0_30 = arith.constant 0 : index
    %c0_31 = arith.constant 0 : index
    %27 = vector.load %arg3[%c0_29, %c0_30, %c0_31] : memref<1x16x96xf32, #tpu.memory_space<vmem>>, vector<1x16x32xf32>
    %28 = vector.shape_cast %27 : vector<1x16x32xf32> to vector<16x32xf32>
    %c0_32 = arith.constant 0 : index
    %c0_33 = arith.constant 0 : index
    %c32 = arith.constant 32 : index
    %29 = vector.load %arg3[%c0_32, %c0_33, %c32] : memref<1x16x96xf32, #tpu.memory_space<vmem>>, vector<1x16x64xf32>
    %30 = vector.shape_cast %29 : vector<1x16x64xf32> to vector<16x64xf32>
    %c0_34 = arith.constant 0 : index
    %c0_35 = arith.constant 0 : index
    %c0_36 = arith.constant 0 : index
    %31 = vector.load %arg4[%c0_34, %c0_35, %c0_36] : memref<1x1x48xf32, #tpu.memory_space<vmem>>, vector<1x1x32xf32>
    %32 = vector.shape_cast %31 : vector<1x1x32xf32> to vector<1x32xf32>
    %c0_37 = arith.constant 0 : index
    %c0_38 = arith.constant 0 : index
    %c32_39 = arith.constant 32 : index
    %33 = vector.load %arg4[%c0_37, %c0_38, %c32_39] : memref<1x1x48xf32, #tpu.memory_space<vmem>>, vector<1x1x16xf32>
    %34 = vector.shape_cast %33 : vector<1x1x16xf32> to vector<1x16xf32>
    %c0_40 = arith.constant 0 : index
    %c0_41 = arith.constant 0 : index
    %c0_42 = arith.constant 0 : index
    %35 = vector.load %arg2[%c0_40, %c0_41, %c0_42] : memref<1x16x4xf32, #tpu.memory_space<vmem>>, vector<1x16x4xf32>
    %36 = vector.shape_cast %35 : vector<1x16x4xf32> to vector<16x4xf32>
    %cst_43 = arith.constant dense<0.000000e+00> : vector<16x32xf32>
    %37 = tpu.matmul %36, %3, %cst_43 {dimension_numbers = #tpu.dot_dimension_numbers<[1], [0], [0], [1], [0, 0, 1, 1], [], []>} : vector<16x4xf32>, vector<4x32xf32>, vector<16x32xf32> -> vector<16x32xf32>
    %cst_44 = arith.constant dense<0.000000e+00> : vector<16x32xf32>
    %38 = tpu.matmul %1, %37, %cst_44 {dimension_numbers = #tpu.dot_dimension_numbers<[1], [0], [0], [1], [0, 0, 1, 1], [], []>} : vector<16x16xf32>, vector<16x32xf32>, vector<16x32xf32> -> vector<16x32xf32>
    %39 = vector.broadcast %10 : vector<1x32xf32> to vector<16x32xf32>
    %40 = arith.addf %38, %39 : vector<16x32xf32>
    %cst_45 = arith.constant dense<0.000000e+00> : vector<1x32xf32>
    %41 = tpu.matmul %2, %40, %cst_45 {dimension_numbers = #tpu.dot_dimension_numbers<[1], [0], [0], [1], [0, 0, 1, 1], [], []>} : vector<1x16xf32>, vector<16x32xf32>, vector<1x32xf32> -> vector<1x32xf32>
    %42 = vector.broadcast %41 : vector<1x32xf32> to vector<16x32xf32>
    %43 = arith.subf %40, %42 : vector<16x32xf32>
    %44 = arith.mulf %43, %43 : vector<16x32xf32>
    %cst_46 = arith.constant dense<0.000000e+00> : vector<1x32xf32>
    %45 = tpu.matmul %2, %44, %cst_46 {dimension_numbers = #tpu.dot_dimension_numbers<[1], [0], [0], [1], [0, 0, 1, 1], [], []>} : vector<1x16xf32>, vector<16x32xf32>, vector<1x32xf32> -> vector<1x32xf32>
    %cst_47 = arith.constant 9.99999974E-6 : f32
    %46 = vector.broadcast %cst_47 : f32 to vector<1x32xf32>
    %47 = arith.addf %45, %46 : vector<1x32xf32>
    %48 = math.rsqrt %47 : vector<1x32xf32>
    %49 = vector.broadcast %48 : vector<1x32xf32> to vector<16x32xf32>
    %50 = arith.mulf %43, %49 : vector<16x32xf32>
    %51 = vector.broadcast %11 : vector<1x32xf32> to vector<16x32xf32>
    %52 = arith.mulf %50, %51 : vector<16x32xf32>
    %53 = vector.broadcast %12 : vector<1x32xf32> to vector<16x32xf32>
    %54 = arith.addf %52, %53 : vector<16x32xf32>
    %cst_48 = arith.constant 0.000000e+00 : f32
    %55 = vector.broadcast %cst_48 : f32 to vector<16x32xf32>
    %56 = arith.cmpf ogt, %54, %55 : vector<16x32xf32>
    %cst_49 = arith.constant 0.000000e+00 : f32
    %57 = vector.broadcast %cst_49 : f32 to vector<16x32xf32>
    %58 = arith.minimumf %54, %57 : vector<16x32xf32>
    %59 = math.exp %58 : vector<16x32xf32>
    %cst_50 = arith.constant 1.000000e+00 : f32
    %60 = vector.broadcast %cst_50 : f32 to vector<16x32xf32>
    %61 = arith.subf %59, %60 : vector<16x32xf32>
    %62 = arith.select %56, %54, %61 : vector<16x32xi1>, vector<16x32xf32>
    %63 = arith.mulf %62, %28 : vector<16x32xf32>
    %cst_51 = arith.constant dense<0.000000e+00> : vector<16x64xf32>
    %64 = tpu.matmul %63, %4, %cst_51 {dimension_numbers = #tpu.dot_dimension_numbers<[1], [0], [0], [1], [0, 0, 1, 1], [], []>} : vector<16x32xf32>, vector<32x64xf32>, vector<16x64xf32> -> vector<16x64xf32>
    %cst_52 = arith.constant dense<0.000000e+00> : vector<16x64xf32>
    %65 = tpu.matmul %1, %64, %cst_52 {dimension_numbers = #tpu.dot_dimension_numbers<[1], [0], [0], [1], [0, 0, 1, 1], [], []>} : vector<16x16xf32>, vector<16x64xf32>, vector<16x64xf32> -> vector<16x64xf32>
    %66 = vector.broadcast %13 : vector<1x64xf32> to vector<16x64xf32>
    %67 = arith.addf %65, %66 : vector<16x64xf32>
    %cst_53 = arith.constant dense<0.000000e+00> : vector<1x64xf32>
    %68 = tpu.matmul %2, %67, %cst_53 {dimension_numbers = #tpu.dot_dimension_numbers<[1], [0], [0], [1], [0, 0, 1, 1], [], []>} : vector<1x16xf32>, vector<16x64xf32>, vector<1x64xf32> -> vector<1x64xf32>
    %69 = vector.broadcast %68 : vector<1x64xf32> to vector<16x64xf32>
    %70 = arith.subf %67, %69 : vector<16x64xf32>
    %71 = arith.mulf %70, %70 : vector<16x64xf32>
    %cst_54 = arith.constant dense<0.000000e+00> : vector<1x64xf32>
    %72 = tpu.matmul %2, %71, %cst_54 {dimension_numbers = #tpu.dot_dimension_numbers<[1], [0], [0], [1], [0, 0, 1, 1], [], []>} : vector<1x16xf32>, vector<16x64xf32>, vector<1x64xf32> -> vector<1x64xf32>
    %cst_55 = arith.constant 9.99999974E-6 : f32
    %73 = vector.broadcast %cst_55 : f32 to vector<1x64xf32>
    %74 = arith.addf %72, %73 : vector<1x64xf32>
    %75 = math.rsqrt %74 : vector<1x64xf32>
    %76 = vector.broadcast %75 : vector<1x64xf32> to vector<16x64xf32>
    %77 = arith.mulf %70, %76 : vector<16x64xf32>
    %78 = vector.broadcast %14 : vector<1x64xf32> to vector<16x64xf32>
    %79 = arith.mulf %77, %78 : vector<16x64xf32>
    %80 = vector.broadcast %15 : vector<1x64xf32> to vector<16x64xf32>
    %81 = arith.addf %79, %80 : vector<16x64xf32>
    %cst_56 = arith.constant 0.000000e+00 : f32
    %82 = vector.broadcast %cst_56 : f32 to vector<16x64xf32>
    %83 = arith.cmpf ogt, %81, %82 : vector<16x64xf32>
    %cst_57 = arith.constant 0.000000e+00 : f32
    %84 = vector.broadcast %cst_57 : f32 to vector<16x64xf32>
    %85 = arith.minimumf %81, %84 : vector<16x64xf32>
    %86 = math.exp %85 : vector<16x64xf32>
    %cst_58 = arith.constant 1.000000e+00 : f32
    %87 = vector.broadcast %cst_58 : f32 to vector<16x64xf32>
    %88 = arith.subf %86, %87 : vector<16x64xf32>
    %89 = arith.select %83, %81, %88 : vector<16x64xi1>, vector<16x64xf32>
    %90 = arith.mulf %89, %30 : vector<16x64xf32>
    %cst_59 = arith.constant dense<0.000000e+00> : vector<16x32xf32>
    %91 = tpu.matmul %90, %5, %cst_59 {dimension_numbers = #tpu.dot_dimension_numbers<[1], [0], [0], [1], [0, 0, 1, 1], [], []>} : vector<16x64xf32>, vector<64x32xf32>, vector<16x32xf32> -> vector<16x32xf32>
    %cst_60 = arith.constant dense<0.000000e+00> : vector<16x32xf32>
    %92 = tpu.matmul %1, %91, %cst_60 {dimension_numbers = #tpu.dot_dimension_numbers<[1], [0], [0], [1], [0, 0, 1, 1], [], []>} : vector<16x16xf32>, vector<16x32xf32>, vector<16x32xf32> -> vector<16x32xf32>
    %93 = vector.broadcast %16 : vector<1x32xf32> to vector<16x32xf32>
    %94 = arith.addf %92, %93 : vector<16x32xf32>
    %cst_61 = arith.constant dense<0.000000e+00> : vector<1x32xf32>
    %95 = tpu.matmul %2, %94, %cst_61 {dimension_numbers = #tpu.dot_dimension_numbers<[1], [0], [0], [1], [0, 0, 1, 1], [], []>} : vector<1x16xf32>, vector<16x32xf32>, vector<1x32xf32> -> vector<1x32xf32>
    %96 = vector.broadcast %95 : vector<1x32xf32> to vector<16x32xf32>
    %97 = arith.subf %94, %96 : vector<16x32xf32>
    %98 = arith.mulf %97, %97 : vector<16x32xf32>
    %cst_62 = arith.constant dense<0.000000e+00> : vector<1x32xf32>
    %99 = tpu.matmul %2, %98, %cst_62 {dimension_numbers = #tpu.dot_dimension_numbers<[1], [0], [0], [1], [0, 0, 1, 1], [], []>} : vector<1x16xf32>, vector<16x32xf32>, vector<1x32xf32> -> vector<1x32xf32>
    %cst_63 = arith.constant 9.99999974E-6 : f32
    %100 = vector.broadcast %cst_63 : f32 to vector<1x32xf32>
    %101 = arith.addf %99, %100 : vector<1x32xf32>
    %102 = math.rsqrt %101 : vector<1x32xf32>
    %103 = vector.broadcast %102 : vector<1x32xf32> to vector<16x32xf32>
    %104 = arith.mulf %97, %103 : vector<16x32xf32>
    %105 = vector.broadcast %17 : vector<1x32xf32> to vector<16x32xf32>
    %106 = arith.mulf %104, %105 : vector<16x32xf32>
    %107 = vector.broadcast %18 : vector<1x32xf32> to vector<16x32xf32>
    %108 = arith.addf %106, %107 : vector<16x32xf32>
    %cst_64 = arith.constant dense<0.000000e+00> : vector<16x32xf32>
    %109 = tpu.matmul %1, %108, %cst_64 {dimension_numbers = #tpu.dot_dimension_numbers<[1], [0], [0], [1], [0, 0, 1, 1], [], []>} : vector<16x16xf32>, vector<16x32xf32>, vector<16x32xf32> -> vector<16x32xf32>
    %cst_65 = arith.constant dense<0.000000e+00> : vector<1x16xf32>
    %110 = tpu.matmul %6, %109, %cst_65 {dimension_numbers = #tpu.dot_dimension_numbers<[1], [1], [0], [0], [0, 0, 1, 0], [], []>} : vector<1x32xf32>, vector<16x32xf32>, vector<1x16xf32> -> vector<1x16xf32>
    %111 = vector.broadcast %19 : vector<1x1xf32> to vector<1x16xf32>
    %112 = arith.addf %110, %111 : vector<1x16xf32>
    %113 = math.tanh %112 : vector<1x16xf32>
    %cst_66 = arith.constant dense<0xFF800000> : vector<1xf32>
    %114 = vector.multi_reduction <maximumf>, %113, %cst_66 [1] : vector<1x16xf32> to vector<1xf32>
    %115 = vector.shape_cast %114 : vector<1xf32> to vector<1x1xf32>
    %116 = vector.broadcast %115 : vector<1x1xf32> to vector<1x16xf32>
    %117 = arith.subf %113, %116 : vector<1x16xf32>
    %118 = math.exp %117 : vector<1x16xf32>
    %cst_67 = arith.constant dense<0.000000e+00> : vector<1xf32>
    %119 = vector.multi_reduction <add>, %118, %cst_67 [1] : vector<1x16xf32> to vector<1xf32>
    %120 = vector.shape_cast %119 : vector<1xf32> to vector<1x1xf32>
    %121 = vector.broadcast %120 : vector<1x1xf32> to vector<1x16xf32>
    %122 = arith.divf %118, %121 : vector<1x16xf32>
    %123 = math.log %120 : vector<1x1xf32>
    %124 = vector.broadcast %123 : vector<1x1xf32> to vector<1x16xf32>
    %125 = arith.subf %117, %124 : vector<1x16xf32>
    %cst_68 = arith.constant dense<0.000000e+00> : vector<1x64xf32>
    %126 = tpu.matmul %2, %90, %cst_68 {dimension_numbers = #tpu.dot_dimension_numbers<[1], [0], [0], [1], [0, 0, 1, 1], [], []>} : vector<1x16xf32>, vector<16x64xf32>, vector<1x64xf32> -> vector<1x64xf32>
    %cst_69 = arith.constant dense<0.000000e+00> : vector<1x32xf32>
    %127 = tpu.matmul %126, %7, %cst_69 {dimension_numbers = #tpu.dot_dimension_numbers<[1], [0], [0], [1], [0, 0, 1, 1], [], []>} : vector<1x64xf32>, vector<64x32xf32>, vector<1x32xf32> -> vector<1x32xf32>
    %128 = arith.addf %127, %20 : vector<1x32xf32>
    %cst_70 = arith.constant dense<0.000000e+00> : vector<1xf32>
    %129 = vector.multi_reduction <add>, %128, %cst_70 [1] : vector<1x32xf32> to vector<1xf32>
    %130 = vector.shape_cast %129 : vector<1xf32> to vector<1x1xf32>
    %cst_71 = arith.constant 3.200000e+01 : f32
    %131 = vector.broadcast %cst_71 : f32 to vector<1x1xf32>
    %132 = arith.divf %130, %131 : vector<1x1xf32>
    %133 = vector.broadcast %132 : vector<1x1xf32> to vector<1x32xf32>
    %134 = arith.subf %128, %133 : vector<1x32xf32>
    %135 = arith.mulf %134, %134 : vector<1x32xf32>
    %cst_72 = arith.constant dense<0.000000e+00> : vector<1xf32>
    %136 = vector.multi_reduction <add>, %135, %cst_72 [1] : vector<1x32xf32> to vector<1xf32>
    %137 = vector.shape_cast %136 : vector<1xf32> to vector<1x1xf32>
    %cst_73 = arith.constant 3.200000e+01 : f32
    %138 = vector.broadcast %cst_73 : f32 to vector<1x1xf32>
    %139 = arith.divf %137, %138 : vector<1x1xf32>
    %140 = vector.broadcast %132 : vector<1x1xf32> to vector<1x32xf32>
    %141 = arith.subf %128, %140 : vector<1x32xf32>
    %cst_74 = arith.constant 9.99999974E-6 : f32
    %142 = vector.broadcast %cst_74 : f32 to vector<1x1xf32>
    %143 = arith.addf %139, %142 : vector<1x1xf32>
    %144 = math.rsqrt %143 : vector<1x1xf32>
    %145 = vector.broadcast %144 : vector<1x1xf32> to vector<1x32xf32>
    %146 = arith.mulf %141, %145 : vector<1x32xf32>
    %147 = arith.mulf %146, %21 : vector<1x32xf32>
    %148 = arith.addf %147, %22 : vector<1x32xf32>
    %149 = arith.mulf %148, %32 : vector<1x32xf32>
    %cst_75 = arith.constant 0.000000e+00 : f32
    %150 = vector.broadcast %cst_75 : f32 to vector<1x32xf32>
    %151 = arith.maximumf %149, %150 : vector<1x32xf32>
    %cst_76 = arith.constant dense<0.000000e+00> : vector<1x16xf32>
    %152 = tpu.matmul %151, %8, %cst_76 {dimension_numbers = #tpu.dot_dimension_numbers<[1], [0], [0], [1], [0, 0, 1, 1], [], []>} : vector<1x32xf32>, vector<32x16xf32>, vector<1x16xf32> -> vector<1x16xf32>
    %153 = arith.addf %152, %23 : vector<1x16xf32>
    %cst_77 = arith.constant dense<0.000000e+00> : vector<1xf32>
    %154 = vector.multi_reduction <add>, %153, %cst_77 [1] : vector<1x16xf32> to vector<1xf32>
    %155 = vector.shape_cast %154 : vector<1xf32> to vector<1x1xf32>
    %cst_78 = arith.constant 1.600000e+01 : f32
    %156 = vector.broadcast %cst_78 : f32 to vector<1x1xf32>
    %157 = arith.divf %155, %156 : vector<1x1xf32>
    %158 = vector.broadcast %157 : vector<1x1xf32> to vector<1x16xf32>
    %159 = arith.subf %153, %158 : vector<1x16xf32>
    %160 = arith.mulf %159, %159 : vector<1x16xf32>
    %cst_79 = arith.constant dense<0.000000e+00> : vector<1xf32>
    %161 = vector.multi_reduction <add>, %160, %cst_79 [1] : vector<1x16xf32> to vector<1xf32>
    %162 = vector.shape_cast %161 : vector<1xf32> to vector<1x1xf32>
    %cst_80 = arith.constant 1.600000e+01 : f32
    %163 = vector.broadcast %cst_80 : f32 to vector<1x1xf32>
    %164 = arith.divf %162, %163 : vector<1x1xf32>
    %165 = vector.broadcast %157 : vector<1x1xf32> to vector<1x16xf32>
    %166 = arith.subf %153, %165 : vector<1x16xf32>
    %cst_81 = arith.constant 9.99999974E-6 : f32
    %167 = vector.broadcast %cst_81 : f32 to vector<1x1xf32>
    %168 = arith.addf %164, %167 : vector<1x1xf32>
    %169 = math.rsqrt %168 : vector<1x1xf32>
    %170 = vector.broadcast %169 : vector<1x1xf32> to vector<1x16xf32>
    %171 = arith.mulf %166, %170 : vector<1x16xf32>
    %172 = arith.mulf %171, %24 : vector<1x16xf32>
    %173 = arith.addf %172, %25 : vector<1x16xf32>
    %174 = arith.mulf %173, %34 : vector<1x16xf32>
    %cst_82 = arith.constant 0.000000e+00 : f32
    %175 = vector.broadcast %cst_82 : f32 to vector<1x16xf32>
    %176 = arith.maximumf %174, %175 : vector<1x16xf32>
    %cst_83 = arith.constant dense<0.000000e+00> : vector<1x1xf32>
    %177 = tpu.matmul %176, %9, %cst_83 {dimension_numbers = #tpu.dot_dimension_numbers<[1], [0], [0], [1], [0, 0, 1, 1], [], []>} : vector<1x16xf32>, vector<16x1xf32>, vector<1x1xf32> -> vector<1x1xf32>
    %178 = arith.addf %177, %26 : vector<1x1xf32>
    %c0_84 = arith.constant 0 : index
    %c0_85 = arith.constant 0 : index
    %c0_86 = arith.constant 0 : index
    %179 = vector.load %arg7[%c0_84, %c0_85, %c0_86] : memref<1x3x16xf32, #tpu.memory_space<vmem>>, vector<1x1x16xf32>
    %180 = vector.shape_cast %179 : vector<1x1x16xf32> to vector<1x16xf32>
    %181 = vector.shape_cast %122 : vector<1x16xf32> to vector<1x1x16xf32>
    tpu.vector_store %arg7[%c0_84, %c0_85, %c0_86], %181 {strides = array<i32>} : memref<1x3x16xf32, #tpu.memory_space<vmem>>, vector<1x1x16xf32>,
    %c0_87 = arith.constant 0 : index
    %c1_88 = arith.constant 1 : index
    %c0_89 = arith.constant 0 : index
    %182 = vector.load %arg7[%c0_87, %c1_88, %c0_89] : memref<1x3x16xf32, #tpu.memory_space<vmem>>, vector<1x1x16xf32>
    %183 = vector.shape_cast %182 : vector<1x1x16xf32> to vector<1x16xf32>
    %184 = vector.shape_cast %125 : vector<1x16xf32> to vector<1x1x16xf32>
    tpu.vector_store %arg7[%c0_87, %c1_88, %c0_89], %184 {strides = array<i32>} : memref<1x3x16xf32, #tpu.memory_space<vmem>>, vector<1x1x16xf32>,
    %185 = vector.shape_cast %178 : vector<1x1xf32> to vector<1x1xf32>
    %186 = vector.broadcast %185 : vector<1x1xf32> to vector<1x16xf32>
    %c0_90 = arith.constant 0 : index
    %c2_91 = arith.constant 2 : index
    %c0_92 = arith.constant 0 : index
    %187 = vector.load %arg7[%c0_90, %c2_91, %c0_92] : memref<1x3x16xf32, #tpu.memory_space<vmem>>, vector<1x1x16xf32>
    %188 = vector.shape_cast %187 : vector<1x1x16xf32> to vector<1x16xf32>
    %189 = vector.shape_cast %186 : vector<1x16xf32> to vector<1x1x16xf32>
    tpu.vector_store %arg7[%c0_90, %c2_91, %c0_92], %189 {strides = array<i32>} : memref<1x3x16xf32, #tpu.memory_space<vmem>>, vector<1x1x16xf32>,
    return
  }
  func.func @transform_0(%arg0: i32) -> (i32, i32, i32) {
    %c0_i32 = arith.constant 0 : i32
    %c0_i32_0 = arith.constant 0 : i32
    %c0_i32_1 = arith.constant 0 : i32
    return %arg0, %c0_i32, %c0_i32_0 : i32, i32, i32
  }
  func.func @transform_1(%arg0: i32) -> (i32, i32, i32) {
    %c0_i32 = arith.constant 0 : i32
    %c0_i32_0 = arith.constant 0 : i32
    %c0_i32_1 = arith.constant 0 : i32
    return %arg0, %c0_i32, %c0_i32_0 : i32, i32, i32
  }
  func.func @transform_2(%arg0: i32) -> (i32, i32, i32) {
    %c0_i32 = arith.constant 0 : i32
    %c0_i32_0 = arith.constant 0 : i32
    %c0_i32_1 = arith.constant 0 : i32
    return %arg0, %c0_i32, %c0_i32_0 : i32, i32, i32
  }
  func.func @transform_3(%arg0: i32) -> (i32, i32, i32) {
    %c0_i32 = arith.constant 0 : i32
    %c0_i32_0 = arith.constant 0 : i32
    %c0_i32_1 = arith.constant 0 : i32
    return %arg0, %c0_i32, %c0_i32_0 : i32, i32, i32
  }
  func.func @transform_4(%arg0: i32) -> (i32, i32) {
    %c0_i32 = arith.constant 0 : i32
    %c0_i32_0 = arith.constant 0 : i32
    %c0_i32_1 = arith.constant 0 : i32
    return %c0_i32, %c0_i32_0 : i32, i32
  }
  func.func @transform_5(%arg0: i32) -> (i32, i32) {
    %c0_i32 = arith.constant 0 : i32
    %c0_i32_0 = arith.constant 0 : i32
    %c0_i32_1 = arith.constant 0 : i32
    return %c0_i32, %c0_i32_0 : i32, i32
  }
  func.func @transform_6(%arg0: i32) -> (i32, i32, i32) {
    %c0_i32 = arith.constant 0 : i32
    %c0_i32_0 = arith.constant 0 : i32
    %c0_i32_1 = arith.constant 0 : i32
    return %arg0, %c0_i32, %c0_i32_0 : i32, i32, i32
  }
}

</mosaic_0001>

<llo_original>
// kernel: ac_gcn_forward.1
$region0: #{ac_gcn_forward.1}
  #allocation0 [shape = 'u32[]', space=smem, size = 0x4, offset = 0x4, fixed_abs, tag = 'smem constant byte address 0x4 - core index']
  #allocation1 [shape = 'u32[144,128]{1,0:T(1,128)}', space=vmem, size = 0x12000, scoped, tag = 'internal scratch']
  %s0 = inlined_call_operand.vmem [shape: f32[4,16,16], index: 0, kind: input, shape index: {}]
  %s1 = inlined_call_operand.vmem [shape: f32[4,16,4], index: 1, kind: input, shape index: {}]
  %s2 = inlined_call_operand.vmem [shape: f32[4,16,96], index: 2, kind: input, shape index: {}]
  %s3 = inlined_call_operand.vmem [shape: f32[4,1,48], index: 3, kind: input, shape index: {}]
  %s4 = inlined_call_operand.vmem [shape: f32[224,64], index: 4, kind: input, shape index: {}]
  %s5 = inlined_call_operand.vmem [shape: f32[24,128], index: 5, kind: input, shape index: {}]
  %s6 = inlined_call_operand.vmem [shape: f32[4,3,16], index: 6, kind: output, shape index: {}]
  %s7 = sld [smem:[#allocation0]]
  $region57: #{ac_gcn_forward.1} parent=0
    _
  %s9 = ssub.s32 1, %s7
  %s10 = scalar_select 0, %s9, %s7
  loop: start=0, step=1, limit=6
  $region2: #{ac_gcn_forward.1} parent=0 // loop_pre_header
    _
  $region3: #{ac_gcn_forward.1} parent=0 // loop_header
    %s12 = sphi 0, %s16
    %p13 = scmp.ge.s32.totalorder %s12, 6
    %s22 = sphi 0, %s24
    %s25 = sphi 0, %s22
    %s26 = sphi 0, %s25
    %s42 = sphi 0, %s26
    %s48 = sphi 0, %s50
    %s51 = sphi 0, %s48
    %s52 = sphi 0, %s51
    %s68 = sphi 0, %s52
    %s74 = sphi 0, %s76
    %s77 = sphi 0, %s74
    %s78 = sphi 0, %s77
    %s94 = sphi 0, %s78
    %s100 = sphi 0, %s102
    %s103 = sphi 0, %s100
    %s104 = sphi 0, %s103
    %s120 = sphi 0, %s104
    %s124 = sphi 0, %s124
    %s126 = sphi 0, %s124
    %s127 = sphi 0, %s126
    %s141 = sphi 0, %s127
    %s145 = sphi 0, %s145
    %s147 = sphi 0, %s145
    %s148 = sphi 0, %s147
    %s162 = sphi 0, %s148
    %s168 = sphi 0, %s170
    %s171 = sphi 0, %s168
    %s172 = sphi 0, %s171
    %s188 = sphi 0, %s172
  $region4: #{ac_gcn_forward.1} parent=0 // loop_header_branch
    %15 = sbr.rel (%p13) target = $region8
  $region5: #{ac_gcn_forward.1} parent=0 // loop_body
    %s17 = ssub.s32 %s12, 1
    %s18 = ssub.s32 %s12, 2
    %s19 = sadd.s32 %s12, 1
    %s20 = ssub.s32 %s12, %s19
    %p21 = scmp.eq.s32.totalorder %s20, 0
    %s23 = sadd.s32 %s22, 1
    %s24 = scalar_select %p21, %s22, %s23
    %p27 = pneg %p21
    %p28 = scmp.eq.s32.totalorder %s12, 3
    %p29 = por %p27, %p28
    %p30 = scmp.ne.s32.totalorder %s22, %s25
    %p31 = scmp.eq.s32.totalorder %s12, 0
    %p32 = por %p30, %p31
    %p33 = scmp.ne.s32.totalorder %s22, %s25
    %p34 = scmp.eq.s32.totalorder %s17, 3
    %p35 = por %p33, %p34
    %p36 = scmp.ne.s32.totalorder %s25, %s26
    %p37 = scmp.eq.s32.totalorder %s17, 0
    %p38 = por %p36, %p37
    %p39 = scmp.ne.s32.totalorder %s25, %s26
    %p40 = scmp.eq.s32.totalorder %s18, 3
    %p41 = por %p39, %p40
    %p43 = scmp.ne.s32.totalorder %s26, %s42
    %p44 = scmp.eq.s32.totalorder %s18, 0
    %p45 = por %p43, %p44
    %s46 = ssub.s32 %s12, %s19
    %p47 = scmp.eq.s32.totalorder %s46, 0
    %s49 = sadd.s32 %s48, 1
    %s50 = scalar_select %p47, %s48, %s49
    %p53 = pneg %p47
    %p54 = scmp.eq.s32.totalorder %s12, 3
    %p55 = por %p53, %p54
    %p56 = scmp.ne.s32.totalorder %s48, %s51
    %p57 = scmp.eq.s32.totalorder %s12, 0
    %p58 = por %p56, %p57
    %p59 = scmp.ne.s32.totalorder %s48, %s51
    %p60 = scmp.eq.s32.totalorder %s17, 3
    %p61 = por %p59, %p60
    %p62 = scmp.ne.s32.totalorder %s51, %s52
    %p63 = scmp.eq.s32.totalorder %s17, 0
    %p64 = por %p62, %p63
    %p65 = scmp.ne.s32.totalorder %s51, %s52
    %p66 = scmp.eq.s32.totalorder %s18, 3
    %p67 = por %p65, %p66
    %p69 = scmp.ne.s32.totalorder %s52, %s68
    %p70 = scmp.eq.s32.totalorder %s18, 0
    %p71 = por %p69, %p70
    %s72 = ssub.s32 %s12, %s19
    %p73 = scmp.eq.s32.totalorder %s72, 0
    %s75 = sadd.s32 %s74, 1
    %s76 = scalar_select %p73, %s74, %s75
    %p79 = pneg %p73
    %p80 = scmp.eq.s32.totalorder %s12, 3
    %p81 = por %p79, %p80
    %p82 = scmp.ne.s32.totalorder %s74, %s77
    %p83 = scmp.eq.s32.totalorder %s12, 0
    %p84 = por %p82, %p83
    %p85 = scmp.ne.s32.totalorder %s74, %s77
    %p86 = scmp.eq.s32.totalorder %s17, 3
    %p87 = por %p85, %p86
    %p88 = scmp.ne.s32.totalorder %s77, %s78
    %p89 = scmp.eq.s32.totalorder %s17, 0
    %p90 = por %p88, %p89
    %p91 = scmp.ne.s32.totalorder %s77, %s78
    %p92 = scmp.eq.s32.totalorder %s18, 3
    %p93 = por %p91, %p92
    %p95 = scmp.ne.s32.totalorder %s78, %s94
    %p96 = scmp.eq.s32.totalorder %s18, 0
    %p97 = por %p95, %p96
    %s98 = ssub.s32 %s12, %s19
    %p99 = scmp.eq.s32.totalorder %s98, 0
    %s101 = sadd.s32 %s100, 1
    %s102 = scalar_select %p99, %s100, %s101
    %p105 = pneg %p99
    %p106 = scmp.eq.s32.totalorder %s12, 3
    %p107 = por %p105, %p106
    %p108 = scmp.ne.s32.totalorder %s100, %s103
    %p109 = scmp.eq.s32.totalorder %s12, 0
    %p110 = por %p108, %p109
    %p111 = scmp.ne.s32.totalorder %s100, %s103
    %p112 = scmp.eq.s32.totalorder %s17, 3
    %p113 = por %p111, %p112
    %p114 = scmp.ne.s32.totalorder %s103, %s104
    %p115 = scmp.eq.s32.totalorder %s17, 0
    %p116 = por %p114, %p115
    %p117 = scmp.ne.s32.totalorder %s103, %s104
    %p118 = scmp.eq.s32.totalorder %s18, 3
    %p119 = por %p117, %p118
    %p121 = scmp.ne.s32.totalorder %s104, %s120
    %p122 = scmp.eq.s32.totalorder %s18, 0
    %p123 = por %p121, %p122
    %s125 = sadd.s32 %s124, 1
    %p128 = scmp.eq.s32.totalorder %s12, 3
    %p129 = scmp.ne.s32.totalorder %s124, %s126
    %p130 = scmp.eq.s32.totalorder %s12, 0
    %p131 = por %p129, %p130
    %p132 = scmp.ne.s32.totalorder %s124, %s126
    %p133 = scmp.eq.s32.totalorder %s17, 3
    %p134 = por %p132, %p133
    %p135 = scmp.ne.s32.totalorder %s126, %s127
    %p136 = scmp.eq.s32.totalorder %s17, 0
    %p137 = por %p135, %p136
    %p138 = scmp.ne.s32.totalorder %s126, %s127
    %p139 = scmp.eq.s32.totalorder %s18, 3
    %p140 = por %p138, %p139
    %p142 = scmp.ne.s32.totalorder %s127, %s141
    %p143 = scmp.eq.s32.totalorder %s18, 0
    %p144 = por %p142, %p143
    %s146 = sadd.s32 %s145, 1
    %p149 = scmp.eq.s32.totalorder %s12, 3
    %p150 = scmp.ne.s32.totalorder %s145, %s147
    %p151 = scmp.eq.s32.totalorder %s12, 0
    %p152 = por %p150, %p151
    %p153 = scmp.ne.s32.totalorder %s145, %s147
    %p154 = scmp.eq.s32.totalorder %s17, 3
    %p155 = por %p153, %p154
    %p156 = scmp.ne.s32.totalorder %s147, %s148
    %p157 = scmp.eq.s32.totalorder %s17, 0
    %p158 = por %p156, %p157
    %p159 = scmp.ne.s32.totalorder %s147, %s148
    %p160 = scmp.eq.s32.totalorder %s18, 3
    %p161 = por %p159, %p160
    %p163 = scmp.ne.s32.totalorder %s148, %s162
    %p164 = scmp.eq.s32.totalorder %s18, 0
    %p165 = por %p163, %p164
    %s166 = ssub.s32 %s12, %s19
    %p167 = scmp.eq.s32.totalorder %s166, 0
    %s169 = sadd.s32 %s168, 1
    %s170 = scalar_select %p167, %s168, %s169
    %p173 = pneg %p167
    %p174 = scmp.eq.s32.totalorder %s12, 3
    %p175 = por %p173, %p174
    %p176 = scmp.ne.s32.totalorder %s168, %s171
    %p177 = scmp.eq.s32.totalorder %s12, 0
    %p178 = por %p176, %p177
    %p179 = scmp.ne.s32.totalorder %s168, %s171
    %p180 = scmp.eq.s32.totalorder %s17, 3
    %p181 = por %p179, %p180
    %p182 = scmp.ne.s32.totalorder %s171, %s172
    %p183 = scmp.eq.s32.totalorder %s17, 0
    %p184 = por %p182, %p183
    %p185 = scmp.ne.s32.totalorder %s171, %s172
    %p186 = scmp.eq.s32.totalorder %s18, 3
    %p187 = por %p185, %p186
    %p189 = scmp.ne.s32.totalorder %s172, %s188
    %p190 = scmp.eq.s32.totalorder %s18, 0
    %p191 = por %p189, %p190
    %p192 = scmp.le.s32.totalorder 1, %s12
    %p193 = scmp.lt.s32.totalorder %s12, 5
    %p194 = pnand %p192, %p193
    %p195 = pneg %p194
    // Predicated region
    $region9: #{ac_gcn_forward.1} parent=5 // pred_check
      _
    $region10: #{ac_gcn_forward.1} parent=5 // pred_check_branch
      %197 = sbr.rel (%p194) target = $region12
    $region11: #{ac_gcn_forward.1} parent=5 // pred_region
      %s198 = ssub.s32 %s12, 1
      // Predicated region
      $region13: #{ac_gcn_forward.1} parent=11 // pred_check
        %p199 = pneg %p137
      $region14: #{ac_gcn_forward.1} parent=11 // pred_check_branch
        %201 = sbr.rel (%p199) target = $region16
      $region15: #{ac_gcn_forward.1} parent=11 // pred_region
        _
      $region16: #{ac_gcn_forward.1} parent=11 // pred_fallthru
        _
      // Predicated region
      $region17: #{ac_gcn_forward.1} parent=11 // pred_check
        %p202 = pneg %p158
      $region18: #{ac_gcn_forward.1} parent=11 // pred_check_branch
        %204 = sbr.rel (%p202) target = $region20
      $region19: #{ac_gcn_forward.1} parent=11 // pred_region
        _
      $region20: #{ac_gcn_forward.1} parent=11 // pred_fallthru
        _
    $region12: #{ac_gcn_forward.1} parent=5 // pred_fallthru
      _
    %p205 = scmp.lt.s32.totalorder %s12, 4
    // Predicated region
    $region21: #{ac_gcn_forward.1} parent=5 // pred_check
      %p206 = pneg %p205
    $region22: #{ac_gcn_forward.1} parent=5 // pred_check_branch
      %208 = sbr.rel (%p206) target = $region24
    $region23: #{ac_gcn_forward.1} parent=5 // pred_region
      // Predicated region
      $region25: #{ac_gcn_forward.1} parent=23 // pred_check
        %p209 = pneg %p32
      $region26: #{ac_gcn_forward.1} parent=23 // pred_check_branch
        %211 = sbr.rel (%p209) target = $region28
      $region27: #{ac_gcn_forward.1} parent=23 // pred_region
        %p212 = scmp.lt.s32.totalorder %s12, 3
        %s213 = scalar_select %p212, %s12, 3
        %s214 = smul.addr %s213, 2
        %s215 = smul.addr %s214, 8
        %s216 = scalar_lea.vmem %s0, %s215
      $region28: #{ac_gcn_forward.1} parent=23 // pred_fallthru
        _
      // Predicated region
      $region29: #{ac_gcn_forward.1} parent=23 // pred_check
        %p217 = pneg %p58
      $region30: #{ac_gcn_forward.1} parent=23 // pred_check_branch
        %219 = sbr.rel (%p217) target = $region32
      $region31: #{ac_gcn_forward.1} parent=23 // pred_region
        %p220 = scmp.lt.s32.totalorder %s12, 3
        %s221 = scalar_select %p220, %s12, 3
        %s222 = smul.addr %s221, 2
        %s223 = smul.addr %s222, 8
        %s224 = scalar_lea.vmem %s1, %s223
      $region32: #{ac_gcn_forward.1} parent=23 // pred_fallthru
        _
      // Predicated region
      $region33: #{ac_gcn_forward.1} parent=23 // pred_check
        %p225 = pneg %p84
      $region34: #{ac_gcn_forward.1} parent=23 // pred_check_branch
        %227 = sbr.rel (%p225) target = $region36
      $region35: #{ac_gcn_forward.1} parent=23 // pred_region
        %p228 = scmp.lt.s32.totalorder %s12, 3
        %s229 = scalar_select %p228, %s12, 3
        %s230 = smul.addr %s229, 2
        %s231 = smul.addr %s230, 8
        %s232 = scalar_lea.vmem %s2, %s231
      $region36: #{ac_gcn_forward.1} parent=23 // pred_fallthru
        _
      // Predicated region
      $region37: #{ac_gcn_forward.1} parent=23 // pred_check
        %p233 = pneg %p110
      $region38: #{ac_gcn_forward.1} parent=23 // pred_check_branch
        %235 = sbr.rel (%p233) target = $region40
      $region39: #{ac_gcn_forward.1} parent=23 // pred_region
        %p236 = scmp.lt.s32.totalorder %s12, 3
        %s237 = scalar_select %p236, %s12, 3
        %s238 = scalar_lea.vmem %s3, %s237
      $region40: #{ac_gcn_forward.1} parent=23 // pred_fallthru
        _
    $region24: #{ac_gcn_forward.1} parent=5 // pred_fallthru
      _
    %p239 = scmp.le.s32.totalorder 1, %s12
    %p240 = scmp.lt.s32.totalorder %s12, 5
    %p241 = pnand %p239, %p240
    %p242 = pneg %p241
    // Predicated region
    $region41: #{ac_gcn_forward.1} parent=5 // pred_check
      _
    $region42: #{ac_gcn_forward.1} parent=5 // pred_check_branch
      %244 = sbr.rel (%p241) target = $region44
    $region43: #{ac_gcn_forward.1} parent=5 // pred_region
      %s245 = ssub.s32 %s12, 1
      %p246 = scmp.lt.s32.totalorder %s17, 3
      %s247 = scalar_select %p246, %s17, 3
      %s248 = smul.addr %s247, 2
      %s249 = smul.addr %s248, 8
      %s250 = scalar_lea.vmem %s0, %s249
      %p251 = pneg %p38
      %p252 = pneg %p35
      %p253 = scmp.lt.s32.totalorder %s17, 3
      %s254 = scalar_select %p253, %s17, 3
      %s255 = smul.addr %s254, 2
      %s256 = smul.addr %s255, 8
      %s257 = scalar_lea.vmem %s1, %s256
      %p258 = pneg %p64
      %p259 = pneg %p61
      %p260 = scmp.lt.s32.totalorder %s17, 3
      %s261 = scalar_select %p260, %s17, 3
      %s262 = smul.addr %s261, 2
      %s263 = smul.addr %s262, 8
      %s264 = scalar_lea.vmem %s2, %s263
      %p265 = pneg %p90
      %p266 = pneg %p87
      %p267 = scmp.lt.s32.totalorder %s17, 3
      %s268 = scalar_select %p267, %s17, 3
      %s269 = scalar_lea.vmem %s3, %s268
      %p270 = pneg %p116
      %p271 = pneg %p113
      %p272 = pneg %p137
      %p273 = pneg %p134
      %p274 = pneg %p158
      %p275 = pneg %p155
      %p276 = pneg %p184
      %p277 = pneg %p181
      %p278 = scmp.lt.s32.totalorder %s17, 3
      %s279 = scalar_select %p278, %s17, 3
      %s280 = smul.addr %s279, 4
      %s281 = scalar_lea.vmem %s6, %s280
      %p282 = scmp.lt.s32.totalorder %s17, 3
      %s283 = scalar_select %p282, %s17, 3
      %s284 = smul.addr %s283, 2
      %s285 = smul.addr %s284, 8
      %s286 = scalar_lea.vmem %s0, %s285
      %p287 = scmp.lt.s32.totalorder %s17, 3
      %s288 = scalar_select %p287, %s17, 3
      %s289 = smul.addr %s288, 2
      %s290 = smul.addr %s289, 8
      %s291 = scalar_lea.vmem %s1, %s290
      %p292 = scmp.lt.s32.totalorder %s17, 3
      %s293 = scalar_select %p292, %s17, 3
      %s294 = smul.addr %s293, 2
      %s295 = smul.addr %s294, 8
      %s296 = scalar_lea.vmem %s2, %s295
      %p297 = scmp.lt.s32.totalorder %s17, 3
      %s298 = scalar_select %p297, %s17, 3
      %s299 = scalar_lea.vmem %s3, %s298
      %p300 = scmp.lt.s32.totalorder %s17, 3
      %s301 = scalar_select %p300, %s17, 3
      %s302 = smul.addr %s301, 4
      %s303 = scalar_lea.vmem %s6, %s302
      %v304 = vld [vmem:[%s286] sm:$0xff]
      %v305 = vld [vmem:[%s286 + $0x8] sm:$0xff]
      %v306 = vld [vmem:[%s4] sm:$0xf]
      %v307 = vld [vmem:[%s4 + $0x8] sm:$0xff]
      %v308 = vld [vmem:[%s4 + $0x10] sm:$0xff]
      %v309 = vld [vmem:[%s4 + $0x18] sm:$0xff]
      %v310 = vld [vmem:[%s4 + $0x20] sm:$0xff]
      %v311 = vld [vmem:[%s4 + $0x28] sm:$0xff]
      %v312 = vld [vmem:[%s4 + $0x30] sm:$0xff]
      %v313 = vld [vmem:[%s4 + $0x38] sm:$0xff]
      %v314 = vld [vmem:[%s4 + $0x40] sm:$0xff]
      %v315 = vld [vmem:[%s4 + $0x48] sm:$0xff]
      %v316 = vld [vmem:[%s4 + $0x50] sm:$0xff]
      %v317 = vld [vmem:[%s4 + $0x58] sm:$0xff]
      %v318 = vld [vmem:[%s4 + $0x60] sm:$0xff]
      %v319 = vld [vmem:[%s4 + $0x68] sm:$0x1]
      %v320 = vld [vmem:[%s4 + $0x70] sm:$0xff]
      %v321 = vld [vmem:[%s4 + $0x78] sm:$0xff]
      %v322 = vld [vmem:[%s4 + $0x80] sm:$0xff]
      %v323 = vld [vmem:[%s4 + $0x88] sm:$0xff]
      %v324 = vld [vmem:[%s4 + $0x90] sm:$0xff]
      %v325 = vld [vmem:[%s4 + $0x98] sm:$0xff]
      %v326 = vld [vmem:[%s4 + $0xa0] sm:$0xff]
      %v327 = vld [vmem:[%s4 + $0xa8] sm:$0xff]
      %v328 = vld [vmem:[%s4 + $0xb0] sm:$0xff]
      %v329 = vld [vmem:[%s4 + $0xb8] sm:$0xff]
      %v330 = vld [vmem:[%s4 + $0xc0] sm:$0xff]
      %v331 = vld [vmem:[%s4 + $0xc8] sm:$0xff]
      %v332 = vld [vmem:[%s4 + $0xd0] sm:$0xff]
      %v333 = vld [vmem:[%s4 + $0xd8] sm:$0xff]
      %v334 = vld [vmem:[%s5] sm:$0x1]
      %v335 = vld [vmem:[%s5 + $0x1] sm:$0x1]
      %v336 = vld [vmem:[%s5 + $0x2] sm:$0x1]
      %v337 = vld [vmem:[%s5 + $0x3] sm:$0x1]
      %v338 = vld [vmem:[%s5 + $0x4] sm:$0x1]
      %v339 = vld [vmem:[%s5 + $0x5] sm:$0x1]
      %v340 = vld [vmem:[%s5 + $0x6] sm:$0x1]
      %v341 = vld [vmem:[%s5 + $0x7] sm:$0x1]
      %v342 = vld [vmem:[%s5 + $0x8] sm:$0x1]
      %v343 = vld [vmem:[%s5 + $0x9] sm:$0x1]
      %v344 = vld [vmem:[%s5 + $0xa] sm:$0x1]
      %v345 = vld [vmem:[%s5 + $0xb] sm:$0x1]
      %v346 = vld [vmem:[%s5 + $0xc] sm:$0x1]
      %v347 = vld [vmem:[%s5 + $0xd] sm:$0x1]
      %v348 = vld [vmem:[%s5 + $0xe] sm:$0x1]
      %v349 = vld [vmem:[%s5 + $0xf] sm:$0x1]
      %v350 = vld [vmem:[%s5 + $0x10] sm:$0x1]
      %v351 = vld [vmem:[%s296] sm:$0xff]
      %v352 = vld [vmem:[%s296 + $0x8] sm:$0xff]
      %v353 = vld [vmem:[%s299] sm:$0x1]
      %v354 = vld [vmem:[%s291] sm:$0xff]
      %v355 = vld [vmem:[%s291 + $0x8] sm:$0xff]
      %vm356 = vcmask 31744
      %v358 = vsel %vm356, %v354, 0
      %v361 = vsel %vm356, %v355, 0
      %vm363 = vcmask 1043456
      %v365 = vsel %vm363, %v306, 0
      %367 = vmatprep.subr.mxu0 0.0
      %368 = vmatpush1.msra.mxu0 %v365
      %369 = vmatprep.subr.mxu0 0.0
      %370 = vmatpush1.msra.mxu0 0.0
      %371 = vmatprep.subr.mxu0 0.0
      %372 = vmatpush1.msra.mxu0 0.0
      %373 = vmatprep.subr.mxu0 0.0
      %374 = vmatpush1.msra.mxu0 0.0
      %375 = vmatprep.subr.mxu0 0.0
      %376 = vmatpush1.msra.mxu0 0.0
      %377 = vmatprep.subr.mxu0 0.0
      %378 = vmatpush1.msra.mxu0 0.0
      %379 = vmatprep.subr.mxu0 0.0
      %380 = vmatpush1.msra.mxu0 0.0
      %381 = vmatprep.subr.mxu0 0.0
      %382 = vmatpush1.msra.mxu0 0.0
      %383 = vmatprep.subr.mxu0 0.0
      %384 = vmatpush1.msra.mxu0 0.0
      %385 = vmatprep.subr.mxu0 0.0
      %386 = vmatpush1.msra.mxu0 0.0
      %387 = vmatprep.subr.mxu0 0.0
      %388 = vmatpush1.msra.mxu0 0.0
      %389 = vmatprep.subr.mxu0 0.0
      %390 = vmatpush1.msra.mxu0 0.0
      %391 = vmatprep.subr.mxu0 0.0
      %392 = vmatpush1.msra.mxu0 0.0
      %393 = vmatprep.subr.mxu0 0.0
      %394 = vmatpush1.msra.mxu0 0.0
      %395 = vmatprep.subr.mxu0 0.0
      %396 = vmatpush1.msra.mxu0 0.0
      %397 = vmatprep.subr.mxu0 0.0
      %398 = vmatpush1.msra.mxu0 0.0
      %399 = vmatprep.subr.mxu0 0.0
      %400 = vmatpush1.msra.mxu0 0.0
      %401 = vmatprep.subr.mxu0 0.0
      %402 = vmatpush1.msra.mxu0 0.0
      %403 = vmatprep.subr.mxu0 0.0
      %404 = vmatpush1.msra.mxu0 0.0
      %405 = vmatprep.subr.mxu0 0.0
      %406 = vmatpush1.msra.mxu0 0.0
      %407 = vmatprep.subr.mxu0 0.0
      %408 = vmatpush1.msra.mxu0 0.0
      %409 = vmatprep.subr.mxu0 0.0
      %410 = vmatpush1.msra.mxu0 0.0
      %411 = vmatprep.subr.mxu0 0.0
      %412 = vmatpush1.msra.mxu0 0.0
      %413 = vmatprep.subr.mxu0 0.0
      %414 = vmatpush1.msra.mxu0 0.0
      %415 = vmatprep.subr.mxu0 0.0
      %416 = vmatpush1.msra.mxu0 0.0
      %417 = vmatprep.subr.mxu0 0.0
      %418 = vmatpush1.msra.mxu0 0.0
      %419 = vmatprep.subr.mxu0 0.0
      %420 = vmatpush1.msra.mxu0 0.0
      %421 = vmatprep.subr.mxu0 0.0
      %422 = vmatpush1.msra.mxu0 0.0
      %423 = vmatprep.subr.mxu0 0.0
      %424 = vmatpush1.msra.mxu0 0.0
      %425 = vmatprep.subr.mxu0 0.0
      %426 = vmatpush1.msra.mxu0 0.0
      %427 = vmatprep.subr.mxu0 0.0
      %428 = vmatpush1.msra.mxu0 0.0
      %429 = vmatprep.subr.mxu0 0.0
      %430 = vmatpush1.msra.mxu0 0.0
      %431 = vmatprep.mubr.f32.mxu0 0.0
      %432 = vmatmul.mubr.f32.gmra.mrb[0].mxu0 %v358
      %v433 = vpop.f32.mrb[0].mxu0
      %v434 = vadd.f32 0.0, %v433
      %v435 = vpop.f32.mrb[0].mxu0
      %436 = vmatprep.mubr.f32.mxu0 0.0
      %437 = vmatmul.mubr.f32.gmra.mrb[0].mxu0 %v361
      %v438 = vpop.f32.mrb[0].mxu0
      %v439 = vadd.f32 0.0, %v438
      %v440 = vpop.f32.mrb[0].mxu0
      %441 = vdwg.mxu0
      %v442 = vlaneseq
      %v443 = vshrl.u32 %v442, 7
      %v444 = vsub.s32 0, %v443
      %v445 = vrot.slane %v334, %v444
      %vm446 = vcmask 130048
      %v448 = vsel %vm446, %v304, 0
      %v451 = vsel %vm446, %v305, 0
      %453 = vmatprep.subr.mxu0 0.0
      %454 = vmatpush1.msra.mxu0 %v434
      %455 = vmatprep.subr.mxu0 0.0
      %456 = vmatpush1.msra.mxu0 %v439
      %457 = vmatprep.subr.mxu0 0.0
      %458 = vmatpush1.msra.mxu0 0.0
      %459 = vmatprep.subr.mxu0 0.0
      %460 = vmatpush1.msra.mxu0 0.0
      %461 = vmatprep.subr.mxu0 0.0
      %462 = vmatpush1.msra.mxu0 0.0
      %463 = vmatprep.subr.mxu0 0.0
      %464 = vmatpush1.msra.mxu0 0.0
      %465 = vmatprep.subr.mxu0 0.0
      %466 = vmatpush1.msra.mxu0 0.0
      %467 = vmatprep.subr.mxu0 0.0
      %468 = vmatpush1.msra.mxu0 0.0
      %469 = vmatprep.subr.mxu0 0.0
      %470 = vmatpush1.msra.mxu0 0.0
      %471 = vmatprep.subr.mxu0 0.0
      %472 = vmatpush1.msra.mxu0 0.0
      %473 = vmatprep.subr.mxu0 0.0
      %474 = vmatpush1.msra.mxu0 0.0
      %475 = vmatprep.subr.mxu0 0.0
      %476 = vmatpush1.msra.mxu0 0.0
      %477 = vmatprep.subr.mxu0 0.0
      %478 = vmatpush1.msra.mxu0 0.0
      %479 = vmatprep.subr.mxu0 0.0
      %480 = vmatpush1.msra.mxu0 0.0
      %481 = vmatprep.subr.mxu0 0.0
      %482 = vmatpush1.msra.mxu0 0.0
      %483 = vmatprep.subr.mxu0 0.0
      %484 = vmatpush1.msra.mxu0 0.0
      %485 = vmatprep.subr.mxu0 0.0
      %486 = vmatpush1.msra.mxu0 0.0
      %487 = vmatprep.subr.mxu0 0.0
      %488 = vmatpush1.msra.mxu0 0.0
      %489 = vmatprep.subr.mxu0 0.0
      %490 = vmatpush1.msra.mxu0 0.0
      %491 = vmatprep.subr.mxu0 0.0
      %492 = vmatpush1.msra.mxu0 0.0
      %493 = vmatprep.subr.mxu0 0.0
      %494 = vmatpush1.msra.mxu0 0.0
      %495 = vmatprep.subr.mxu0 0.0
      %496 = vmatpush1.msra.mxu0 0.0
      %497 = vmatprep.subr.mxu0 0.0
      %498 = vmatpush1.msra.mxu0 0.0
      %499 = vmatprep.subr.mxu0 0.0
      %500 = vmatpush1.msra.mxu0 0.0
      %501 = vmatprep.subr.mxu0 0.0
      %502 = vmatpush1.msra.mxu0 0.0
      %503 = vmatprep.subr.mxu0 0.0
      %504 = vmatpush1.msra.mxu0 0.0
      %505 = vmatprep.subr.mxu0 0.0
      %506 = vmatpush1.msra.mxu0 0.0
      %507 = vmatprep.subr.mxu0 0.0
      %508 = vmatpush1.msra.mxu0 0.0
      %509 = vmatprep.subr.mxu0 0.0
      %510 = vmatpush1.msra.mxu0 0.0
      %511 = vmatprep.subr.mxu0 0.0
      %512 = vmatpush1.msra.mxu0 0.0
      %513 = vmatprep.subr.mxu0 0.0
      %514 = vmatpush1.msra.mxu0 0.0
      %515 = vmatprep.subr.mxu0 0.0
      %516 = vmatpush1.msra.mxu0 0.0
      %517 = vmatprep.mubr.f32.mxu0 0.0
      %518 = vmatmul.mubr.f32.gmra.mrb[0].mxu0 %v448
      %v519 = vpop.f32.mrb[0].mxu0
      %v520 = vadd.f32 %v445, %v519
      %v521 = vpop.f32.mrb[0].mxu0
      %522 = vmatprep.mubr.f32.mxu0 0.0
      %523 = vmatmul.mubr.f32.gmra.mrb[0].mxu0 %v451
      %v524 = vpop.f32.mrb[0].mxu0
      %v525 = vadd.f32 %v445, %v524
      %v526 = vpop.f32.mrb[0].mxu0
      %527 = vdwg.mxu0
      %v529 = vsel %vm446, 0.0625, 0
      %531 = vmatprep.subr.mxu0 0.0
      %532 = vmatpush1.msra.mxu0 %v520
      %533 = vmatprep.subr.mxu0 0.0
      %534 = vmatpush1.msra.mxu0 %v525
      %535 = vmatprep.subr.mxu0 0.0
      %536 = vmatpush1.msra.mxu0 0.0
      %537 = vmatprep.subr.mxu0 0.0
      %538 = vmatpush1.msra.mxu0 0.0
      %539 = vmatprep.subr.mxu0 0.0
      %540 = vmatpush1.msra.mxu0 0.0
      %541 = vmatprep.subr.mxu0 0.0
      %542 = vmatpush1.msra.mxu0 0.0
      %543 = vmatprep.subr.mxu0 0.0
      %544 = vmatpush1.msra.mxu0 0.0
      %545 = vmatprep.subr.mxu0 0.0
      %546 = vmatpush1.msra.mxu0 0.0
      %547 = vmatprep.subr.mxu0 0.0
      %548 = vmatpush1.msra.mxu0 0.0
      %549 = vmatprep.subr.mxu0 0.0
      %550 = vmatpush1.msra.mxu0 0.0
      %551 = vmatprep.subr.mxu0 0.0
      %552 = vmatpush1.msra.mxu0 0.0
      %553 = vmatprep.subr.mxu0 0.0
      %554 = vmatpush1.msra.mxu0 0.0
      %555 = vmatprep.subr.mxu0 0.0
      %556 = vmatpush1.msra.mxu0 0.0
      %557 = vmatprep.subr.mxu0 0.0
      %558 = vmatpush1.msra.mxu0 0.0
      %559 = vmatprep.subr.mxu0 0.0
      %560 = vmatpush1.msra.mxu0 0.0
      %561 = vmatprep.subr.mxu0 0.0
      %562 = vmatpush1.msra.mxu0 0.0
      %563 = vmatprep.subr.mxu0 0.0
      %564 = vmatpush1.msra.mxu0 0.0
      %565 = vmatprep.subr.mxu0 0.0
      %566 = vmatpush1.msra.mxu0 0.0
      %567 = vmatprep.subr.mxu0 0.0
      %568 = vmatpush1.msra.mxu0 0.0
      %569 = vmatprep.subr.mxu0 0.0
      %570 = vmatpush1.msra.mxu0 0.0
      %571 = vmatprep.subr.mxu0 0.0
      %572 = vmatpush1.msra.mxu0 0.0
      %573 = vmatprep.subr.mxu0 0.0
      %574 = vmatpush1.msra.mxu0 0.0
      %575 = vmatprep.subr.mxu0 0.0
      %576 = vmatpush1.msra.mxu0 0.0
      %577 = vmatprep.subr.mxu0 0.0
      %578 = vmatpush1.msra.mxu0 0.0
      %579 = vmatprep.subr.mxu0 0.0
      %580 = vmatpush1.msra.mxu0 0.0
      %581 = vmatprep.subr.mxu0 0.0
      %582 = vmatpush1.msra.mxu0 0.0
      %583 = vmatprep.subr.mxu0 0.0
      %584 = vmatpush1.msra.mxu0 0.0
      %585 = vmatprep.subr.mxu0 0.0
      %586 = vmatpush1.msra.mxu0 0.0
      %587 = vmatprep.subr.mxu0 0.0
      %588 = vmatpush1.msra.mxu0 0.0
      %589 = vmatprep.subr.mxu0 0.0
      %590 = vmatpush1.msra.mxu0 0.0
      %591 = vmatprep.subr.mxu0 0.0
      %592 = vmatpush1.msra.mxu0 0.0
      %593 = vmatprep.subr.mxu0 0.0
      %594 = vmatpush1.msra.mxu0 0.0
      %595 = vmatprep.mubr.f32.mxu0 0.0
      %596 = vmatmul.mubr.f32.gmra.mrb[0].mxu0 %v529
      %v597 = vpop.f32.mrb[0].mxu0
      %v598 = vadd.f32 0.0, %v597
      %v599 = vpop.f32.mrb[0].mxu0
      %600 = vdwg.mxu0
      %v601 = vlaneseq
      %v602 = vshrl.u32 %v601, 7
      %v603 = vsub.s32 0, %v602
      %v604 = vrot.slane %v598, %v603
      %v605 = vsub.f32 %v520, %v604
      %v606 = vsub.f32 %v525, %v604
      %v607 = vmul.f32 %v605, %v605
      %v608 = vmul.f32 %v606, %v606
      %609 = vmatprep.subr.mxu0 0.0
      %610 = vmatpush1.msra.mxu0 %v607
      %611 = vmatprep.subr.mxu0 0.0
      %612 = vmatpush1.msra.mxu0 %v608
      %613 = vmatprep.subr.mxu0 0.0
      %614 = vmatpush1.msra.mxu0 0.0
      %615 = vmatprep.subr.mxu0 0.0
      %616 = vmatpush1.msra.mxu0 0.0
      %617 = vmatprep.subr.mxu0 0.0
      %618 = vmatpush1.msra.mxu0 0.0
      %619 = vmatprep.subr.mxu0 0.0
      %620 = vmatpush1.msra.mxu0 0.0
      %621 = vmatprep.subr.mxu0 0.0
      %622 = vmatpush1.msra.mxu0 0.0
      %623 = vmatprep.subr.mxu0 0.0
      %624 = vmatpush1.msra.mxu0 0.0
      %625 = vmatprep.subr.mxu0 0.0
      %626 = vmatpush1.msra.mxu0 0.0
      %627 = vmatprep.subr.mxu0 0.0
      %628 = vmatpush1.msra.mxu0 0.0
      %629 = vmatprep.subr.mxu0 0.0
      %630 = vmatpush1.msra.mxu0 0.0
      %631 = vmatprep.subr.mxu0 0.0
      %632 = vmatpush1.msra.mxu0 0.0
      %633 = vmatprep.subr.mxu0 0.0
      %634 = vmatpush1.msra.mxu0 0.0
      %635 = vmatprep.subr.mxu0 0.0
      %636 = vmatpush1.msra.mxu0 0.0
      %637 = vmatprep.subr.mxu0 0.0
      %638 = vmatpush1.msra.mxu0 0.0
      %639 = vmatprep.subr.mxu0 0.0
      %640 = vmatpush1.msra.mxu0 0.0
      %641 = vmatprep.subr.mxu0 0.0
      %642 = vmatpush1.msra.mxu0 0.0
      %643 = vmatprep.subr.mxu0 0.0
      %644 = vmatpush1.msra.mxu0 0.0
      %645 = vmatprep.subr.mxu0 0.0
      %646 = vmatpush1.msra.mxu0 0.0
      %647 = vmatprep.subr.mxu0 0.0
      %648 = vmatpush1.msra.mxu0 0.0
      %649 = vmatprep.subr.mxu0 0.0
      %650 = vmatpush1.msra.mxu0 0.0
      %651 = vmatprep.subr.mxu0 0.0
      %652 = vmatpush1.msra.mxu0 0.0
      %653 = vmatprep.subr.mxu0 0.0
      %654 = vmatpush1.msra.mxu0 0.0
      %655 = vmatprep.subr.mxu0 0.0
      %656 = vmatpush1.msra.mxu0 0.0
      %657 = vmatprep.subr.mxu0 0.0
      %658 = vmatpush1.msra.mxu0 0.0
      %659 = vmatprep.subr.mxu0 0.0
      %660 = vmatpush1.msra.mxu0 0.0
      %661 = vmatprep.subr.mxu0 0.0
      %662 = vmatpush1.msra.mxu0 0.0
      %663 = vmatprep.subr.mxu0 0.0
      %664 = vmatpush1.msra.mxu0 0.0
      %665 = vmatprep.subr.mxu0 0.0
      %666 = vmatpush1.msra.mxu0 0.0
      %667 = vmatprep.subr.mxu0 0.0
      %668 = vmatpush1.msra.mxu0 0.0
      %669 = vmatprep.subr.mxu0 0.0
      %670 = vmatpush1.msra.mxu0 0.0
      %671 = vmatprep.subr.mxu0 0.0
      %672 = vmatpush1.msra.mxu0 0.0
      %673 = vmatprep.mubr.f32.mxu0 0.0
      %674 = vmatmul.mubr.f32.gmra.mrb[0].mxu0 %v529
      %v675 = vpop.f32.mrb[0].mxu0
      %v676 = vadd.f32 1e-05, %v675
      %v677 = vpop.f32.mrb[0].mxu0
      %678 = vdwg.mxu0
      %v679 = vrsqrt.pop %v676
      %v680 = vlaneseq
      %v681 = vshrl.u32 %v680, 7
      %v682 = vsub.s32 0, %v681
      %v683 = vrot.slane %v679, %v682
      %v684 = vmul.f32 %v605, %v683
      %v685 = vmul.f32 %v606, %v683
      %v686 = vlaneseq
      %v687 = vshrl.u32 %v686, 7
      %v688 = vsub.s32 0, %v687
      %v689 = vrot.slane %v335, %v688
      %v690 = vmul.f32 %v684, %v689
      %v691 = vmul.f32 %v685, %v689
      %v692 = vlaneseq
      %v693 = vshrl.u32 %v692, 7
      %v694 = vsub.s32 0, %v693
      %v695 = vrot.slane %v336, %v694
      %v696 = vadd.f32 %v690, %v695
      %v697 = vadd.f32 %v691, %v695
      %vm698 = vcmp.gt.f32.partialorder %v696, 0.0
      %vm699 = vcmp.gt.f32.partialorder %v697, 0.0
      %v700 = vmin.f32 %v696, 0.0
      %v701 = vmin.f32 %v697, 0.0
      %v702 = vmul.f32 %v700, 1.442695
      %v703 = vpow.pop %v702
      %v704 = vmul.f32 %v701, 1.442695
      %v705 = vpow.pop %v704
      %v706 = vsub.f32 %v703, 1.0
      %v707 = vsub.f32 %v705, 1.0
      %v708 = vsel %vm698, %v696, %v706
      %v709 = vsel %vm699, %v697, %v707
      %v710 = vmul.f32 %v708, %v351
      %v711 = vmul.f32 %v709, %v352
      %vm712 = vcmask 261120
      %v714 = vsel %vm712, %v710, 0
      %v717 = vsel %vm712, %v711, 0
      %719 = vmatprep.subr.mxu0 0.0
      %720 = vmatpush1.msra.mxu0 %v307
      %721 = vmatprep.subr.mxu0 0.0
      %722 = vmatpush1.msra.mxu0 %v308
      %723 = vmatprep.subr.mxu0 0.0
      %724 = vmatpush1.msra.mxu0 %v309
      %725 = vmatprep.subr.mxu0 0.0
      %726 = vmatpush1.msra.mxu0 %v310
      %727 = vmatprep.subr.mxu0 0.0
      %728 = vmatpush1.msra.mxu0 0.0
      %729 = vmatprep.subr.mxu0 0.0
      %730 = vmatpush1.msra.mxu0 0.0
      %731 = vmatprep.subr.mxu0 0.0
      %732 = vmatpush1.msra.mxu0 0.0
      %733 = vmatprep.subr.mxu0 0.0
      %734 = vmatpush1.msra.mxu0 0.0
      %735 = vmatprep.subr.mxu0 0.0
      %736 = vmatpush1.msra.mxu0 0.0
      %737 = vmatprep.subr.mxu0 0.0
      %738 = vmatpush1.msra.mxu0 0.0
      %739 = vmatprep.subr.mxu0 0.0
      %740 = vmatpush1.msra.mxu0 0.0
      %741 = vmatprep.subr.mxu0 0.0
      %742 = vmatpush1.msra.mxu0 0.0
      %743 = vmatprep.subr.mxu0 0.0
      %744 = vmatpush1.msra.mxu0 0.0
      %745 = vmatprep.subr.mxu0 0.0
      %746 = vmatpush1.msra.mxu0 0.0
      %747 = vmatprep.subr.mxu0 0.0
      %748 = vmatpush1.msra.mxu0 0.0
      %749 = vmatprep.subr.mxu0 0.0
      %750 = vmatpush1.msra.mxu0 0.0
      %751 = vmatprep.subr.mxu0 0.0
      %752 = vmatpush1.msra.mxu0 0.0
      %753 = vmatprep.subr.mxu0 0.0
      %754 = vmatpush1.msra.mxu0 0.0
      %755 = vmatprep.subr.mxu0 0.0
      %756 = vmatpush1.msra.mxu0 0.0
      %757 = vmatprep.subr.mxu0 0.0
      %758 = vmatpush1.msra.mxu0 0.0
      %759 = vmatprep.subr.mxu0 0.0
      %760 = vmatpush1.msra.mxu0 0.0
      %761 = vmatprep.subr.mxu0 0.0
      %762 = vmatpush1.msra.mxu0 0.0
      %763 = vmatprep.subr.mxu0 0.0
      %764 = vmatpush1.msra.mxu0 0.0
      %765 = vmatprep.subr.mxu0 0.0
      %766 = vmatpush1.msra.mxu0 0.0
      %767 = vmatprep.subr.mxu0 0.0
      %768 = vmatpush1.msra.mxu0 0.0
      %769 = vmatprep.subr.mxu0 0.0
      %770 = vmatpush1.msra.mxu0 0.0
      %771 = vmatprep.subr.mxu0 0.0
      %772 = vmatpush1.msra.mxu0 0.0
      %773 = vmatprep.subr.mxu0 0.0
      %774 = vmatpush1.msra.mxu0 0.0
      %775 = vmatprep.subr.mxu0 0.0
      %776 = vmatpush1.msra.mxu0 0.0
      %777 = vmatprep.subr.mxu0 0.0
      %778 = vmatpush1.msra.mxu0 0.0
      %779 = vmatprep.subr.mxu0 0.0
      %780 = vmatpush1.msra.mxu0 0.0
      %781 = vmatprep.subr.mxu0 0.0
      %782 = vmatpush1.msra.mxu0 0.0
      %783 = vmatprep.mubr.f32.mxu0 0.0
      %784 = vmatmul.mubr.f32.gmra.mrb[0].mxu0 %v714
      %v785 = vpop.f32.mrb[0].mxu0
      %v786 = vadd.f32 0.0, %v785
      %v787 = vpop.f32.mrb[0].mxu0
      %788 = vmatprep.mubr.f32.mxu0 0.0
      %789 = vmatmul.mubr.f32.gmra.mrb[0].mxu0 %v717
      %v790 = vpop.f32.mrb[0].mxu0
      %v791 = vadd.f32 0.0, %v790
      %v792 = vpop.f32.mrb[0].mxu0
      %793 = vdwg.mxu0
      %v794 = vlaneseq
      %v795 = vshrl.u32 %v794, 7
      %v796 = vsub.s32 0, %v795
      %v797 = vrot.slane %v337, %v796
      %798 = vmatprep.subr.mxu0 0.0
      %799 = vmatpush1.msra.mxu0 %v786
      %800 = vmatprep.subr.mxu0 0.0
      %801 = vmatpush1.msra.mxu0 %v791
      %802 = vmatprep.subr.mxu0 0.0
      %803 = vmatpush1.msra.mxu0 0.0
      %804 = vmatprep.subr.mxu0 0.0
      %805 = vmatpush1.msra.mxu0 0.0
      %806 = vmatprep.subr.mxu0 0.0
      %807 = vmatpush1.msra.mxu0 0.0
      %808 = vmatprep.subr.mxu0 0.0
      %809 = vmatpush1.msra.mxu0 0.0
      %810 = vmatprep.subr.mxu0 0.0
      %811 = vmatpush1.msra.mxu0 0.0
      %812 = vmatprep.subr.mxu0 0.0
      %813 = vmatpush1.msra.mxu0 0.0
      %814 = vmatprep.subr.mxu0 0.0
      %815 = vmatpush1.msra.mxu0 0.0
      %816 = vmatprep.subr.mxu0 0.0
      %817 = vmatpush1.msra.mxu0 0.0
      %818 = vmatprep.subr.mxu0 0.0
      %819 = vmatpush1.msra.mxu0 0.0
      %820 = vmatprep.subr.mxu0 0.0
      %821 = vmatpush1.msra.mxu0 0.0
      %822 = vmatprep.subr.mxu0 0.0
      %823 = vmatpush1.msra.mxu0 0.0
      %824 = vmatprep.subr.mxu0 0.0
      %825 = vmatpush1.msra.mxu0 0.0
      %826 = vmatprep.subr.mxu0 0.0
      %827 = vmatpush1.msra.mxu0 0.0
      %828 = vmatprep.subr.mxu0 0.0
      %829 = vmatpush1.msra.mxu0 0.0
      %830 = vmatprep.subr.mxu0 0.0
      %831 = vmatpush1.msra.mxu0 0.0
      %832 = vmatprep.subr.mxu0 0.0
      %833 = vmatpush1.msra.mxu0 0.0
      %834 = vmatprep.subr.mxu0 0.0
      %835 = vmatpush1.msra.mxu0 0.0
      %836 = vmatprep.subr.mxu0 0.0
      %837 = vmatpush1.msra.mxu0 0.0
      %838 = vmatprep.subr.mxu0 0.0
      %839 = vmatpush1.msra.mxu0 0.0
      %840 = vmatprep.subr.mxu0 0.0
      %841 = vmatpush1.msra.mxu0 0.0
      %842 = vmatprep.subr.mxu0 0.0
      %843 = vmatpush1.msra.mxu0 0.0
      %844 = vmatprep.subr.mxu0 0.0
      %845 = vmatpush1.msra.mxu0 0.0
      %846 = vmatprep.subr.mxu0 0.0
      %847 = vmatpush1.msra.mxu0 0.0
      %848 = vmatprep.subr.mxu0 0.0
      %849 = vmatpush1.msra.mxu0 0.0
      %850 = vmatprep.subr.mxu0 0.0
      %851 = vmatpush1.msra.mxu0 0.0
      %852 = vmatprep.subr.mxu0 0.0
      %853 = vmatpush1.msra.mxu0 0.0
      %854 = vmatprep.subr.mxu0 0.0
      %855 = vmatpush1.msra.mxu0 0.0
      %856 = vmatprep.subr.mxu0 0.0
      %857 = vmatpush1.msra.mxu0 0.0
      %858 = vmatprep.subr.mxu0 0.0
      %859 = vmatpush1.msra.mxu0 0.0
      %860 = vmatprep.subr.mxu0 0.0
      %861 = vmatpush1.msra.mxu0 0.0
      %862 = vmatprep.mubr.f32.mxu0 0.0
      %863 = vmatmul.mubr.f32.gmra.mrb[0].mxu0 %v448
      %v864 = vpop.f32.mrb[0].mxu0
      %v865 = vadd.f32 %v797, %v864
      %v866 = vpop.f32.mrb[0].mxu0
      %867 = vmatprep.mubr.f32.mxu0 0.0
      %868 = vmatmul.mubr.f32.gmra.mrb[0].mxu0 %v451
      %v869 = vpop.f32.mrb[0].mxu0
      %v870 = vadd.f32 %v797, %v869
      %v871 = vpop.f32.mrb[0].mxu0
      %872 = vdwg.mxu0
      %873 = vmatprep.subr.mxu0 0.0
      %874 = vmatpush1.msra.mxu0 %v865
      %875 = vmatprep.subr.mxu0 0.0
      %876 = vmatpush1.msra.mxu0 %v870
      %877 = vmatprep.subr.mxu0 0.0
      %878 = vmatpush1.msra.mxu0 0.0
      %879 = vmatprep.subr.mxu0 0.0
      %880 = vmatpush1.msra.mxu0 0.0
      %881 = vmatprep.subr.mxu0 0.0
      %882 = vmatpush1.msra.mxu0 0.0
      %883 = vmatprep.subr.mxu0 0.0
      %884 = vmatpush1.msra.mxu0 0.0
      %885 = vmatprep.subr.mxu0 0.0
      %886 = vmatpush1.msra.mxu0 0.0
      %887 = vmatprep.subr.mxu0 0.0
      %888 = vmatpush1.msra.mxu0 0.0
      %889 = vmatprep.subr.mxu0 0.0
      %890 = vmatpush1.msra.mxu0 0.0
      %891 = vmatprep.subr.mxu0 0.0
      %892 = vmatpush1.msra.mxu0 0.0
      %893 = vmatprep.subr.mxu0 0.0
      %894 = vmatpush1.msra.mxu0 0.0
      %895 = vmatprep.subr.mxu0 0.0
      %896 = vmatpush1.msra.mxu0 0.0
      %897 = vmatprep.subr.mxu0 0.0
      %898 = vmatpush1.msra.mxu0 0.0
      %899 = vmatprep.subr.mxu0 0.0
      %900 = vmatpush1.msra.mxu0 0.0
      %901 = vmatprep.subr.mxu0 0.0
      %902 = vmatpush1.msra.mxu0 0.0
      %903 = vmatprep.subr.mxu0 0.0
      %904 = vmatpush1.msra.mxu0 0.0
      %905 = vmatprep.subr.mxu0 0.0
      %906 = vmatpush1.msra.mxu0 0.0
      %907 = vmatprep.subr.mxu0 0.0
      %908 = vmatpush1.msra.mxu0 0.0
      %909 = vmatprep.subr.mxu0 0.0
      %910 = vmatpush1.msra.mxu0 0.0
      %911 = vmatprep.subr.mxu0 0.0
      %912 = vmatpush1.msra.mxu0 0.0
      %913 = vmatprep.subr.mxu0 0.0
      %914 = vmatpush1.msra.mxu0 0.0
      %915 = vmatprep.subr.mxu0 0.0
      %916 = vmatpush1.msra.mxu0 0.0
      %917 = vmatprep.subr.mxu0 0.0
      %918 = vmatpush1.msra.mxu0 0.0
      %919 = vmatprep.subr.mxu0 0.0
      %920 = vmatpush1.msra.mxu0 0.0
      %921 = vmatprep.subr.mxu0 0.0
      %922 = vmatpush1.msra.mxu0 0.0
      %923 = vmatprep.subr.mxu0 0.0
      %924 = vmatpush1.msra.mxu0 0.0
      %925 = vmatprep.subr.mxu0 0.0
      %926 = vmatpush1.msra.mxu0 0.0
      %927 = vmatprep.subr.mxu0 0.0
      %928 = vmatpush1.msra.mxu0 0.0
      %929 = vmatprep.subr.mxu0 0.0
      %930 = vmatpush1.msra.mxu0 0.0
      %931 = vmatprep.subr.mxu0 0.0
      %932 = vmatpush1.msra.mxu0 0.0
      %933 = vmatprep.subr.mxu0 0.0
      %934 = vmatpush1.msra.mxu0 0.0
      %935 = vmatprep.subr.mxu0 0.0
      %936 = vmatpush1.msra.mxu0 0.0
      %937 = vmatprep.mubr.f32.mxu0 0.0
      %938 = vmatmul.mubr.f32.gmra.mrb[0].mxu0 %v529
      %v939 = vpop.f32.mrb[0].mxu0
      %v940 = vadd.f32 0.0, %v939
      %v941 = vpop.f32.mrb[0].mxu0
      %942 = vdwg.mxu0
      %v943 = vlaneseq
      %v944 = vshrl.u32 %v943, 7
      %v945 = vsub.s32 0, %v944
      %v946 = vrot.slane %v940, %v945
      %v947 = vsub.f32 %v865, %v946
      %v948 = vsub.f32 %v870, %v946
      %v949 = vmul.f32 %v947, %v947
      %v950 = vmul.f32 %v948, %v948
      %951 = vmatprep.subr.mxu0 0.0
      %952 = vmatpush1.msra.mxu0 %v949
      %953 = vmatprep.subr.mxu0 0.0
      %954 = vmatpush1.msra.mxu0 %v950
      %955 = vmatprep.subr.mxu0 0.0
      %956 = vmatpush1.msra.mxu0 0.0
      %957 = vmatprep.subr.mxu0 0.0
      %958 = vmatpush1.msra.mxu0 0.0
      %959 = vmatprep.subr.mxu0 0.0
      %960 = vmatpush1.msra.mxu0 0.0
      %961 = vmatprep.subr.mxu0 0.0
      %962 = vmatpush1.msra.mxu0 0.0
      %963 = vmatprep.subr.mxu0 0.0
      %964 = vmatpush1.msra.mxu0 0.0
      %965 = vmatprep.subr.mxu0 0.0
      %966 = vmatpush1.msra.mxu0 0.0
      %967 = vmatprep.subr.mxu0 0.0
      %968 = vmatpush1.msra.mxu0 0.0
      %969 = vmatprep.subr.mxu0 0.0
      %970 = vmatpush1.msra.mxu0 0.0
      %971 = vmatprep.subr.mxu0 0.0
      %972 = vmatpush1.msra.mxu0 0.0
      %973 = vmatprep.subr.mxu0 0.0
      %974 = vmatpush1.msra.mxu0 0.0
      %975 = vmatprep.subr.mxu0 0.0
      %976 = vmatpush1.msra.mxu0 0.0
      %977 = vmatprep.subr.mxu0 0.0
      %978 = vmatpush1.msra.mxu0 0.0
      %979 = vmatprep.subr.mxu0 0.0
      %980 = vmatpush1.msra.mxu0 0.0
      %981 = vmatprep.subr.mxu0 0.0
      %982 = vmatpush1.msra.mxu0 0.0
      %983 = vmatprep.subr.mxu0 0.0
      %984 = vmatpush1.msra.mxu0 0.0
      %985 = vmatprep.subr.mxu0 0.0
      %986 = vmatpush1.msra.mxu0 0.0
      %987 = vmatprep.subr.mxu0 0.0
      %988 = vmatpush1.msra.mxu0 0.0
      %989 = vmatprep.subr.mxu0 0.0
      %990 = vmatpush1.msra.mxu0 0.0
      %991 = vmatprep.subr.mxu0 0.0
      %992 = vmatpush1.msra.mxu0 0.0
      %993 = vmatprep.subr.mxu0 0.0
      %994 = vmatpush1.msra.mxu0 0.0
      %995 = vmatprep.subr.mxu0 0.0
      %996 = vmatpush1.msra.mxu0 0.0
      %997 = vmatprep.subr.mxu0 0.0
      %998 = vmatpush1.msra.mxu0 0.0
      %999 = vmatprep.subr.mxu0 0.0
      %1000 = vmatpush1.msra.mxu0 0.0
      %1001 = vmatprep.subr.mxu0 0.0
      %1002 = vmatpush1.msra.mxu0 0.0
      %1003 = vmatprep.subr.mxu0 0.0
      %1004 = vmatpush1.msra.mxu0 0.0
      %1005 = vmatprep.subr.mxu0 0.0
      %1006 = vmatpush1.msra.mxu0 0.0
      %1007 = vmatprep.subr.mxu0 0.0
      %1008 = vmatpush1.msra.mxu0 0.0
      %1009 = vmatprep.subr.mxu0 0.0
      %1010 = vmatpush1.msra.mxu0 0.0
      %1011 = vmatprep.subr.mxu0 0.0
      %1012 = vmatpush1.msra.mxu0 0.0
      %1013 = vmatprep.subr.mxu0 0.0
      %1014 = vmatpush1.msra.mxu0 0.0
      %1015 = vmatprep.mubr.f32.mxu0 0.0
      %1016 = vmatmul.mubr.f32.gmra.mrb[0].mxu0 %v529
      %v1017 = vpop.f32.mrb[0].mxu0
      %v1018 = vadd.f32 1e-05, %v1017
      %v1019 = vpop.f32.mrb[0].mxu0
      %1020 = vdwg.mxu0
      %v1021 = vrsqrt.pop %v1018
      %v1022 = vlaneseq
      %v1023 = vshrl.u32 %v1022, 7
      %v1024 = vsub.s32 0, %v1023
      %v1025 = vrot.slane %v1021, %v1024
      %v1026 = vmul.f32 %v947, %v1025
      %v1027 = vmul.f32 %v948, %v1025
      %v1028 = vlaneseq
      %v1029 = vshrl.u32 %v1028, 7
      %v1030 = vsub.s32 0, %v1029
      %v1031 = vrot.slane %v338, %v1030
      %v1032 = vmul.f32 %v1026, %v1031
      %v1033 = vmul.f32 %v1027, %v1031
      %v1034 = vlaneseq
      %v1035 = vshrl.u32 %v1034, 7
      %v1036 = vsub.s32 0, %v1035
      %v1037 = vrot.slane %v339, %v1036
      %v1038 = vadd.f32 %v1032, %v1037
      %v1039 = vadd.f32 %v1033, %v1037
      %vm1040 = vcmp.gt.f32.partialorder %v1038, 0.0
      %vm1041 = vcmp.gt.f32.partialorder %v1039, 0.0
      %v1042 = vmin.f32 %v1038, 0.0
      %v1043 = vmin.f32 %v1039, 0.0
      %v1044 = vmul.f32 %v1042, 1.442695
      %v1045 = vpow.pop %v1044
      %v1046 = vmul.f32 %v1043, 1.442695
      %v1047 = vpow.pop %v1046
      %v1048 = vsub.f32 %v1045, 1.0
      %v1049 = vsub.f32 %v1047, 1.0
      %v1050 = vsel %vm1040, %v1038, %v1048
      %v1051 = vsel %vm1041, %v1039, %v1049
      %1054 = vrot.lane.b32.xlu0 %v351, 96
      %v1055 = vpop.permute.xlu0 %1054
      %1056 = vrot.lane.b32.xlu0 %v352, 96
      %v1057 = vpop.permute.xlu0 %1056
      %v1060 = vmul.f32 %v1050, %v1055
      %v1061 = vmul.f32 %v1051, %v1057
      %vm1062 = vcmask 523264
      %v1064 = vsel %vm1062, %v1060, 0
      %v1067 = vsel %vm1062, %v1061, 0
      %1069 = vmatprep.subr.mxu0 0.0
      %1070 = vmatpush1.msra.mxu0 %v311
      %1071 = vmatprep.subr.mxu0 0.0
      %1072 = vmatpush1.msra.mxu0 %v312
      %1073 = vmatprep.subr.mxu0 0.0
      %1074 = vmatpush1.msra.mxu0 %v313
      %1075 = vmatprep.subr.mxu0 0.0
      %1076 = vmatpush1.msra.mxu0 %v314
      %1077 = vmatprep.subr.mxu0 0.0
      %1078 = vmatpush1.msra.mxu0 %v315
      %1079 = vmatprep.subr.mxu0 0.0
      %1080 = vmatpush1.msra.mxu0 %v316
      %1081 = vmatprep.subr.mxu0 0.0
      %1082 = vmatpush1.msra.mxu0 %v317
      %1083 = vmatprep.subr.mxu0 0.0
      %1084 = vmatpush1.msra.mxu0 %v318
      %1085 = vmatprep.subr.mxu0 0.0
      %1086 = vmatpush1.msra.mxu0 0.0
      %1087 = vmatprep.subr.mxu0 0.0
      %1088 = vmatpush1.msra.mxu0 0.0
      %1089 = vmatprep.subr.mxu0 0.0
      %1090 = vmatpush1.msra.mxu0 0.0
      %1091 = vmatprep.subr.mxu0 0.0
      %1092 = vmatpush1.msra.mxu0 0.0
      %1093 = vmatprep.subr.mxu0 0.0
      %1094 = vmatpush1.msra.mxu0 0.0
      %1095 = vmatprep.subr.mxu0 0.0
      %1096 = vmatpush1.msra.mxu0 0.0
      %1097 = vmatprep.subr.mxu0 0.0
      %1098 = vmatpush1.msra.mxu0 0.0
      %1099 = vmatprep.subr.mxu0 0.0
      %1100 = vmatpush1.msra.mxu0 0.0
      %1101 = vmatprep.subr.mxu0 0.0
      %1102 = vmatpush1.msra.mxu0 0.0
      %1103 = vmatprep.subr.mxu0 0.0
      %1104 = vmatpush1.msra.mxu0 0.0
      %1105 = vmatprep.subr.mxu0 0.0
      %1106 = vmatpush1.msra.mxu0 0.0
      %1107 = vmatprep.subr.mxu0 0.0
      %1108 = vmatpush1.msra.mxu0 0.0
      %1109 = vmatprep.subr.mxu0 0.0
      %1110 = vmatpush1.msra.mxu0 0.0
      %1111 = vmatprep.subr.mxu0 0.0
      %1112 = vmatpush1.msra.mxu0 0.0
      %1113 = vmatprep.subr.mxu0 0.0
      %1114 = vmatpush1.msra.mxu0 0.0
      %1115 = vmatprep.subr.mxu0 0.0
      %1116 = vmatpush1.msra.mxu0 0.0
      %1117 = vmatprep.subr.mxu0 0.0
      %1118 = vmatpush1.msra.mxu0 0.0
      %1119 = vmatprep.subr.mxu0 0.0
      %1120 = vmatpush1.msra.mxu0 0.0
      %1121 = vmatprep.subr.mxu0 0.0
      %1122 = vmatpush1.msra.mxu0 0.0
      %1123 = vmatprep.subr.mxu0 0.0
      %1124 = vmatpush1.msra.mxu0 0.0
      %1125 = vmatprep.subr.mxu0 0.0
      %1126 = vmatpush1.msra.mxu0 0.0
      %1127 = vmatprep.subr.mxu0 0.0
      %1128 = vmatpush1.msra.mxu0 0.0
      %1129 = vmatprep.subr.mxu0 0.0
      %1130 = vmatpush1.msra.mxu0 0.0
      %1131 = vmatprep.subr.mxu0 0.0
      %1132 = vmatpush1.msra.mxu0 0.0
      %1133 = vmatprep.mubr.f32.mxu0 0.0
      %1134 = vmatmul.mubr.f32.gmra.mrb[0].mxu0 %v1064
      %v1135 = vpop.f32.mrb[0].mxu0
      %v1136 = vadd.f32 0.0, %v1135
      %v1137 = vpop.f32.mrb[0].mxu0
      %1138 = vmatprep.mubr.f32.mxu0 0.0
      %1139 = vmatmul.mubr.f32.gmra.mrb[0].mxu0 %v1067
      %v1140 = vpop.f32.mrb[0].mxu0
      %v1141 = vadd.f32 0.0, %v1140
      %v1142 = vpop.f32.mrb[0].mxu0
      %1143 = vdwg.mxu0
      %v1144 = vlaneseq
      %v1145 = vshrl.u32 %v1144, 7
      %v1146 = vsub.s32 0, %v1145
      %v1147 = vrot.slane %v340, %v1146
      %1148 = vmatprep.subr.mxu0 0.0
      %1149 = vmatpush1.msra.mxu0 %v1136
      %1150 = vmatprep.subr.mxu0 0.0
      %1151 = vmatpush1.msra.mxu0 %v1141
      %1152 = vmatprep.subr.mxu0 0.0
      %1153 = vmatpush1.msra.mxu0 0.0
      %1154 = vmatprep.subr.mxu0 0.0
      %1155 = vmatpush1.msra.mxu0 0.0
      %1156 = vmatprep.subr.mxu0 0.0
      %1157 = vmatpush1.msra.mxu0 0.0
      %1158 = vmatprep.subr.mxu0 0.0
      %1159 = vmatpush1.msra.mxu0 0.0
      %1160 = vmatprep.subr.mxu0 0.0
      %1161 = vmatpush1.msra.mxu0 0.0
      %1162 = vmatprep.subr.mxu0 0.0
      %1163 = vmatpush1.msra.mxu0 0.0
      %1164 = vmatprep.subr.mxu0 0.0
      %1165 = vmatpush1.msra.mxu0 0.0
      %1166 = vmatprep.subr.mxu0 0.0
      %1167 = vmatpush1.msra.mxu0 0.0
      %1168 = vmatprep.subr.mxu0 0.0
      %1169 = vmatpush1.msra.mxu0 0.0
      %1170 = vmatprep.subr.mxu0 0.0
      %1171 = vmatpush1.msra.mxu0 0.0
      %1172 = vmatprep.subr.mxu0 0.0
      %1173 = vmatpush1.msra.mxu0 0.0
      %1174 = vmatprep.subr.mxu0 0.0
      %1175 = vmatpush1.msra.mxu0 0.0
      %1176 = vmatprep.subr.mxu0 0.0
      %1177 = vmatpush1.msra.mxu0 0.0
      %1178 = vmatprep.subr.mxu0 0.0
      %1179 = vmatpush1.msra.mxu0 0.0
      %1180 = vmatprep.subr.mxu0 0.0
      %1181 = vmatpush1.msra.mxu0 0.0
      %1182 = vmatprep.subr.mxu0 0.0
      %1183 = vmatpush1.msra.mxu0 0.0
      %1184 = vmatprep.subr.mxu0 0.0
      %1185 = vmatpush1.msra.mxu0 0.0
      %1186 = vmatprep.subr.mxu0 0.0
      %1187 = vmatpush1.msra.mxu0 0.0
      %1188 = vmatprep.subr.mxu0 0.0
      %1189 = vmatpush1.msra.mxu0 0.0
      %1190 = vmatprep.subr.mxu0 0.0
      %1191 = vmatpush1.msra.mxu0 0.0
      %1192 = vmatprep.subr.mxu0 0.0
      %1193 = vmatpush1.msra.mxu0 0.0
      %1194 = vmatprep.subr.mxu0 0.0
      %1195 = vmatpush1.msra.mxu0 0.0
      %1196 = vmatprep.subr.mxu0 0.0
      %1197 = vmatpush1.msra.mxu0 0.0
      %1198 = vmatprep.subr.mxu0 0.0
      %1199 = vmatpush1.msra.mxu0 0.0
      %1200 = vmatprep.subr.mxu0 0.0
      %1201 = vmatpush1.msra.mxu0 0.0
      %1202 = vmatprep.subr.mxu0 0.0
      %1203 = vmatpush1.msra.mxu0 0.0
      %1204 = vmatprep.subr.mxu0 0.0
      %1205 = vmatpush1.msra.mxu0 0.0
      %1206 = vmatprep.subr.mxu0 0.0
      %1207 = vmatpush1.msra.mxu0 0.0
      %1208 = vmatprep.subr.mxu0 0.0
      %1209 = vmatpush1.msra.mxu0 0.0
      %1210 = vmatprep.subr.mxu0 0.0
      %1211 = vmatpush1.msra.mxu0 0.0
      %1212 = vmatprep.mubr.f32.mxu0 0.0
      %1213 = vmatmul.mubr.f32.gmra.mrb[0].mxu0 %v448
      %v1214 = vpop.f32.mrb[0].mxu0
      %v1215 = vadd.f32 %v1147, %v1214
      %v1216 = vpop.f32.mrb[0].mxu0
      %1217 = vmatprep.mubr.f32.mxu0 0.0
      %1218 = vmatmul.mubr.f32.gmra.mrb[0].mxu0 %v451
      %v1219 = vpop.f32.mrb[0].mxu0
      %v1220 = vadd.f32 %v1147, %v1219
      %v1221 = vpop.f32.mrb[0].mxu0
      %1222 = vdwg.mxu0
      %1223 = vmatprep.subr.mxu0 0.0
      %1224 = vmatpush1.msra.mxu0 %v1215
      %1225 = vmatprep.subr.mxu0 0.0
      %1226 = vmatpush1.msra.mxu0 %v1220
      %1227 = vmatprep.subr.mxu0 0.0
      %1228 = vmatpush1.msra.mxu0 0.0
      %1229 = vmatprep.subr.mxu0 0.0
      %1230 = vmatpush1.msra.mxu0 0.0
      %1231 = vmatprep.subr.mxu0 0.0
      %1232 = vmatpush1.msra.mxu0 0.0
      %1233 = vmatprep.subr.mxu0 0.0
      %1234 = vmatpush1.msra.mxu0 0.0
      %1235 = vmatprep.subr.mxu0 0.0
      %1236 = vmatpush1.msra.mxu0 0.0
      %1237 = vmatprep.subr.mxu0 0.0
      %1238 = vmatpush1.msra.mxu0 0.0
      %1239 = vmatprep.subr.mxu0 0.0
      %1240 = vmatpush1.msra.mxu0 0.0
      %1241 = vmatprep.subr.mxu0 0.0
      %1242 = vmatpush1.msra.mxu0 0.0
      %1243 = vmatprep.subr.mxu0 0.0
      %1244 = vmatpush1.msra.mxu0 0.0
      %1245 = vmatprep.subr.mxu0 0.0
      %1246 = vmatpush1.msra.mxu0 0.0
      %1247 = vmatprep.subr.mxu0 0.0
      %1248 = vmatpush1.msra.mxu0 0.0
      %1249 = vmatprep.subr.mxu0 0.0
      %1250 = vmatpush1.msra.mxu0 0.0
      %1251 = vmatprep.subr.mxu0 0.0
      %1252 = vmatpush1.msra.mxu0 0.0
      %1253 = vmatprep.subr.mxu0 0.0
      %1254 = vmatpush1.msra.mxu0 0.0
      %1255 = vmatprep.subr.mxu0 0.0
      %1256 = vmatpush1.msra.mxu0 0.0
      %1257 = vmatprep.subr.mxu0 0.0
      %1258 = vmatpush1.msra.mxu0 0.0
      %1259 = vmatprep.subr.mxu0 0.0
      %1260 = vmatpush1.msra.mxu0 0.0
      %1261 = vmatprep.subr.mxu0 0.0
      %1262 = vmatpush1.msra.mxu0 0.0
      %1263 = vmatprep.subr.mxu0 0.0
      %1264 = vmatpush1.msra.mxu0 0.0
      %1265 = vmatprep.subr.mxu0 0.0
      %1266 = vmatpush1.msra.mxu0 0.0
      %1267 = vmatprep.subr.mxu0 0.0
      %1268 = vmatpush1.msra.mxu0 0.0
      %1269 = vmatprep.subr.mxu0 0.0
      %1270 = vmatpush1.msra.mxu0 0.0
      %1271 = vmatprep.subr.mxu0 0.0
      %1272 = vmatpush1.msra.mxu0 0.0
      %1273 = vmatprep.subr.mxu0 0.0
      %1274 = vmatpush1.msra.mxu0 0.0
      %1275 = vmatprep.subr.mxu0 0.0
      %1276 = vmatpush1.msra.mxu0 0.0
      %1277 = vmatprep.subr.mxu0 0.0
      %1278 = vmatpush1.msra.mxu0 0.0
      %1279 = vmatprep.subr.mxu0 0.0
      %1280 = vmatpush1.msra.mxu0 0.0
      %1281 = vmatprep.subr.mxu0 0.0
      %1282 = vmatpush1.msra.mxu0 0.0
      %1283 = vmatprep.subr.mxu0 0.0
      %1284 = vmatpush1.msra.mxu0 0.0
      %1285 = vmatprep.subr.mxu0 0.0
      %1286 = vmatpush1.msra.mxu0 0.0
      %1287 = vmatprep.mubr.f32.mxu0 0.0
      %1288 = vmatmul.mubr.f32.gmra.mrb[0].mxu0 %v529
      %v1289 = vpop.f32.mrb[0].mxu0
      %v1290 = vadd.f32 0.0, %v1289
      %v1291 = vpop.f32.mrb[0].mxu0
      %1292 = vdwg.mxu0
      %v1293 = vlaneseq
      %v1294 = vshrl.u32 %v1293, 7
      %v1295 = vsub.s32 0, %v1294
      %v1296 = vrot.slane %v1290, %v1295
      %v1297 = vsub.f32 %v1215, %v1296
      %v1298 = vsub.f32 %v1220, %v1296
      %v1299 = vmul.f32 %v1297, %v1297
      %v1300 = vmul.f32 %v1298, %v1298
      %1301 = vmatprep.subr.mxu0 0.0
      %1302 = vmatpush1.msra.mxu0 %v1299
      %1303 = vmatprep.subr.mxu0 0.0
      %1304 = vmatpush1.msra.mxu0 %v1300
      %1305 = vmatprep.subr.mxu0 0.0
      %1306 = vmatpush1.msra.mxu0 0.0
      %1307 = vmatprep.subr.mxu0 0.0
      %1308 = vmatpush1.msra.mxu0 0.0
      %1309 = vmatprep.subr.mxu0 0.0
      %1310 = vmatpush1.msra.mxu0 0.0
      %1311 = vmatprep.subr.mxu0 0.0
      %1312 = vmatpush1.msra.mxu0 0.0
      %1313 = vmatprep.subr.mxu0 0.0
      %1314 = vmatpush1.msra.mxu0 0.0
      %1315 = vmatprep.subr.mxu0 0.0
      %1316 = vmatpush1.msra.mxu0 0.0
      %1317 = vmatprep.subr.mxu0 0.0
      %1318 = vmatpush1.msra.mxu0 0.0
      %1319 = vmatprep.subr.mxu0 0.0
      %1320 = vmatpush1.msra.mxu0 0.0
      %1321 = vmatprep.subr.mxu0 0.0
      %1322 = vmatpush1.msra.mxu0 0.0
      %1323 = vmatprep.subr.mxu0 0.0
      %1324 = vmatpush1.msra.mxu0 0.0
      %1325 = vmatprep.subr.mxu0 0.0
      %1326 = vmatpush1.msra.mxu0 0.0
      %1327 = vmatprep.subr.mxu0 0.0
      %1328 = vmatpush1.msra.mxu0 0.0
      %1329 = vmatprep.subr.mxu0 0.0
      %1330 = vmatpush1.msra.mxu0 0.0
      %1331 = vmatprep.subr.mxu0 0.0
      %1332 = vmatpush1.msra.mxu0 0.0
      %1333 = vmatprep.subr.mxu0 0.0
      %1334 = vmatpush1.msra.mxu0 0.0
      %1335 = vmatprep.subr.mxu0 0.0
      %1336 = vmatpush1.msra.mxu0 0.0
      %1337 = vmatprep.subr.mxu0 0.0
      %1338 = vmatpush1.msra.mxu0 0.0
      %1339 = vmatprep.subr.mxu0 0.0
      %1340 = vmatpush1.msra.mxu0 0.0
      %1341 = vmatprep.subr.mxu0 0.0
      %1342 = vmatpush1.msra.mxu0 0.0
      %1343 = vmatprep.subr.mxu0 0.0
      %1344 = vmatpush1.msra.mxu0 0.0
      %1345 = vmatprep.subr.mxu0 0.0
      %1346 = vmatpush1.msra.mxu0 0.0
      %1347 = vmatprep.subr.mxu0 0.0
      %1348 = vmatpush1.msra.mxu0 0.0
      %1349 = vmatprep.subr.mxu0 0.0
      %1350 = vmatpush1.msra.mxu0 0.0
      %1351 = vmatprep.subr.mxu0 0.0
      %1352 = vmatpush1.msra.mxu0 0.0
      %1353 = vmatprep.subr.mxu0 0.0
      %1354 = vmatpush1.msra.mxu0 0.0
      %1355 = vmatprep.subr.mxu0 0.0
      %1356 = vmatpush1.msra.mxu0 0.0
      %1357 = vmatprep.subr.mxu0 0.0
      %1358 = vmatpush1.msra.mxu0 0.0
      %1359 = vmatprep.subr.mxu0 0.0
      %1360 = vmatpush1.msra.mxu0 0.0
      %1361 = vmatprep.subr.mxu0 0.0
      %1362 = vmatpush1.msra.mxu0 0.0
      %1363 = vmatprep.subr.mxu0 0.0
      %1364 = vmatpush1.msra.mxu0 0.0
      %1365 = vmatprep.mubr.f32.mxu0 0.0
      %1366 = vmatmul.mubr.f32.gmra.mrb[0].mxu0 %v529
      %v1367 = vpop.f32.mrb[0].mxu0
      %v1368 = vadd.f32 1e-05, %v1367
      %v1369 = vpop.f32.mrb[0].mxu0
      %1370 = vdwg.mxu0
      %v1371 = vrsqrt.pop %v1368
      %v1372 = vlaneseq
      %v1373 = vshrl.u32 %v1372, 7
      %v1374 = vsub.s32 0, %v1373
      %v1375 = vrot.slane %v1371, %v1374
      %v1376 = vmul.f32 %v1297, %v1375
      %v1377 = vmul.f32 %v1298, %v1375
      %v1378 = vlaneseq
      %v1379 = vshrl.u32 %v1378, 7
      %v1380 = vsub.s32 0, %v1379
      %v1381 = vrot.slane %v341, %v1380
      %v1382 = vmul.f32 %v1376, %v1381
      %v1383 = vmul.f32 %v1377, %v1381
      %v1384 = vlaneseq
      %v1385 = vshrl.u32 %v1384, 7
      %v1386 = vsub.s32 0, %v1385
      %v1387 = vrot.slane %v342, %v1386
      %v1388 = vadd.f32 %v1382, %v1387
      %v1389 = vadd.f32 %v1383, %v1387
      %1390 = vmatprep.subr.mxu0 0.0
      %1391 = vmatpush1.msra.mxu0 %v1388
      %1392 = vmatprep.subr.mxu0 0.0
      %1393 = vmatpush1.msra.mxu0 %v1389
      %1394 = vmatprep.subr.mxu0 0.0
      %1395 = vmatpush1.msra.mxu0 0.0
      %1396 = vmatprep.subr.mxu0 0.0
      %1397 = vmatpush1.msra.mxu0 0.0
      %1398 = vmatprep.subr.mxu0 0.0
      %1399 = vmatpush1.msra.mxu0 0.0
      %1400 = vmatprep.subr.mxu0 0.0
      %1401 = vmatpush1.msra.mxu0 0.0
      %1402 = vmatprep.subr.mxu0 0.0
      %1403 = vmatpush1.msra.mxu0 0.0
      %1404 = vmatprep.subr.mxu0 0.0
      %1405 = vmatpush1.msra.mxu0 0.0
      %1406 = vmatprep.subr.mxu0 0.0
      %1407 = vmatpush1.msra.mxu0 0.0
      %1408 = vmatprep.subr.mxu0 0.0
      %1409 = vmatpush1.msra.mxu0 0.0
      %1410 = vmatprep.subr.mxu0 0.0
      %1411 = vmatpush1.msra.mxu0 0.0
      %1412 = vmatprep.subr.mxu0 0.0
      %1413 = vmatpush1.msra.mxu0 0.0
      %1414 = vmatprep.subr.mxu0 0.0
      %1415 = vmatpush1.msra.mxu0 0.0
      %1416 = vmatprep.subr.mxu0 0.0
      %1417 = vmatpush1.msra.mxu0 0.0
      %1418 = vmatprep.subr.mxu0 0.0
      %1419 = vmatpush1.msra.mxu0 0.0
      %1420 = vmatprep.subr.mxu0 0.0
      %1421 = vmatpush1.msra.mxu0 0.0
      %1422 = vmatprep.subr.mxu0 0.0
      %1423 = vmatpush1.msra.mxu0 0.0
      %1424 = vmatprep.subr.mxu0 0.0
      %1425 = vmatpush1.msra.mxu0 0.0
      %1426 = vmatprep.subr.mxu0 0.0
      %1427 = vmatpush1.msra.mxu0 0.0
      %1428 = vmatprep.subr.mxu0 0.0
      %1429 = vmatpush1.msra.mxu0 0.0
      %1430 = vmatprep.subr.mxu0 0.0
      %1431 = vmatpush1.msra.mxu0 0.0
      %1432 = vmatprep.subr.mxu0 0.0
      %1433 = vmatpush1.msra.mxu0 0.0
      %1434 = vmatprep.subr.mxu0 0.0
      %1435 = vmatpush1.msra.mxu0 0.0
      %1436 = vmatprep.subr.mxu0 0.0
      %1437 = vmatpush1.msra.mxu0 0.0
      %1438 = vmatprep.subr.mxu0 0.0
      %1439 = vmatpush1.msra.mxu0 0.0
      %1440 = vmatprep.subr.mxu0 0.0
      %1441 = vmatpush1.msra.mxu0 0.0
      %1442 = vmatprep.subr.mxu0 0.0
      %1443 = vmatpush1.msra.mxu0 0.0
      %1444 = vmatprep.subr.mxu0 0.0
      %1445 = vmatpush1.msra.mxu0 0.0
      %1446 = vmatprep.subr.mxu0 0.0
      %1447 = vmatpush1.msra.mxu0 0.0
      %1448 = vmatprep.subr.mxu0 0.0
      %1449 = vmatpush1.msra.mxu0 0.0
      %1450 = vmatprep.subr.mxu0 0.0
      %1451 = vmatpush1.msra.mxu0 0.0
      %1452 = vmatprep.subr.mxu0 0.0
      %1453 = vmatpush1.msra.mxu0 0.0
      %1454 = vmatprep.mubr.f32.mxu0 0.0
      %1455 = vmatmul.mubr.f32.gmra.mrb[0].mxu0 %v448
      %v1456 = vpop.f32.mrb[0].mxu0
      %v1457 = vadd.f32 0.0, %v1456
      %v1458 = vpop.f32.mrb[0].mxu0
      %1459 = vmatprep.mubr.f32.mxu0 0.0
      %1460 = vmatmul.mubr.f32.gmra.mrb[0].mxu0 %v451
      %v1461 = vpop.f32.mrb[0].mxu0
      %v1462 = vadd.f32 0.0, %v1461
      %v1463 = vpop.f32.mrb[0].mxu0
      %1464 = vdwg.mxu0
      %1466 = vset.pattern.permute.xlu0 0
      %1467 = vperm.xlu0 %1466, %v343
      %v1468 = vpop.permute.xlu0 %1467
      %v1471 = vsel %vm712, %v319, 0
      %v1474 = vsel %vm712, %v1457, 0
      %v1477 = vsel %vm712, %v1462, 0
      %1479 = vmatprep.subr.mxu0 0.0
      %1480 = vmatpush1.xpose.msra.mxu0 %v1474
      %1481 = vmatprep.subr.mxu0 0.0
      %1482 = vmatpush1.xpose.msra.mxu0 %v1477
      %1483 = vmatprep.subr.mxu0 0.0
      %1484 = vmatpush1.xpose.msra.mxu0 0.0
      %1485 = vmatprep.subr.mxu0 0.0
      %1486 = vmatpush1.xpose.msra.mxu0 0.0
      %1487 = vmatprep.subr.mxu0 0.0
      %1488 = vmatpush1.xpose.msra.mxu0 0.0
      %1489 = vmatprep.subr.mxu0 0.0
      %1490 = vmatpush1.xpose.msra.mxu0 0.0
      %1491 = vmatprep.subr.mxu0 0.0
      %1492 = vmatpush1.xpose.msra.mxu0 0.0
      %1493 = vmatprep.subr.mxu0 0.0
      %1494 = vmatpush1.xpose.msra.mxu0 0.0
      %1495 = vmatprep.subr.mxu0 0.0
      %1496 = vmatpush1.xpose.msra.mxu0 0.0
      %1497 = vmatprep.subr.mxu0 0.0
      %1498 = vmatpush1.xpose.msra.mxu0 0.0
      %1499 = vmatprep.subr.mxu0 0.0
      %1500 = vmatpush1.xpose.msra.mxu0 0.0
      %1501 = vmatprep.subr.mxu0 0.0
      %1502 = vmatpush1.xpose.msra.mxu0 0.0
      %1503 = vmatprep.subr.mxu0 0.0
      %1504 = vmatpush1.xpose.msra.mxu0 0.0
      %1505 = vmatprep.subr.mxu0 0.0
      %1506 = vmatpush1.xpose.msra.mxu0 0.0
      %1507 = vmatprep.subr.mxu0 0.0
      %1508 = vmatpush1.xpose.msra.mxu0 0.0
      %1509 = vmatprep.subr.mxu0 0.0
      %1510 = vmatpush1.xpose.msra.mxu0 0.0
      %1511 = vmatprep.subr.mxu0 0.0
      %1512 = vmatpush1.xpose.msra.mxu0 0.0
      %1513 = vmatprep.subr.mxu0 0.0
      %1514 = vmatpush1.xpose.msra.mxu0 0.0
      %1515 = vmatprep.subr.mxu0 0.0
      %1516 = vmatpush1.xpose.msra.mxu0 0.0
      %1517 = vmatprep.subr.mxu0 0.0
      %1518 = vmatpush1.xpose.msra.mxu0 0.0
      %1519 = vmatprep.subr.mxu0 0.0
      %1520 = vmatpush1.xpose.msra.mxu0 0.0
      %1521 = vmatprep.subr.mxu0 0.0
      %1522 = vmatpush1.xpose.msra.mxu0 0.0
      %1523 = vmatprep.subr.mxu0 0.0
      %1524 = vmatpush1.xpose.msra.mxu0 0.0
      %1525 = vmatprep.subr.mxu0 0.0
      %1526 = vmatpush1.xpose.msra.mxu0 0.0
      %1527 = vmatprep.subr.mxu0 0.0
      %1528 = vmatpush1.xpose.msra.mxu0 0.0
      %1529 = vmatprep.subr.mxu0 0.0
      %1530 = vmatpush1.xpose.msra.mxu0 0.0
      %1531 = vmatprep.subr.mxu0 0.0
      %1532 = vmatpush1.xpose.msra.mxu0 0.0
      %1533 = vmatprep.subr.mxu0 0.0
      %1534 = vmatpush1.xpose.msra.mxu0 0.0
      %1535 = vmatprep.subr.mxu0 0.0
      %1536 = vmatpush1.xpose.msra.mxu0 0.0
      %1537 = vmatprep.subr.mxu0 0.0
      %1538 = vmatpush1.xpose.msra.mxu0 0.0
      %1539 = vmatprep.subr.mxu0 0.0
      %1540 = vmatpush1.xpose.msra.mxu0 0.0
      %1541 = vmatprep.subr.mxu0 0.0
      %1542 = vmatpush1.xpose.msra.mxu0 0.0
      %1543 = vmatprep.mubr.f32.mxu0 0.0
      %1544 = vmatmul.mubr.f32.gmra.mrb[0].mxu0 %v1471
      %v1545 = vpop.f32.mrb[0].mxu0
      %v1546 = vadd.f32 %v1468, %v1545
      %v1547 = vpop.f32.mrb[0].mxu0
      %1548 = vdwg.mxu0
      %v1549 = vtanh.pop %v1546
      %vm1550 = vcmask 122880
      %v1551 = vsel %vm1550, %v1549, -inf
      %1552 = vmax.xlane.f32.xlu0 %v1551
      %v1553 = vpop.xlane.xlu0 %1552
      %v1554 = vsub.f32 %v1549, %v1553
      %v1555 = vmul.f32 %v1554, 1.442695
      %v1556 = vpow.pop %v1555
      %v1557 = vsel %vm1550, %v1556, 0.0
      %1558 = vadd.xlane.f32.xlu0 %v1557
      %v1559 = vpop.xlane.xlu0 %1558
      %v1560 = vrcp.pop %v1559
      %v1561 = vmul.f32 %v1556, %v1560
      %v1562 = vlog2.pop %v1559
      %v1563 = vmul.f32 %v1562, 0.6931472
      %v1564 = vsub.f32 %v1554, %v1563
      %1565 = vmatprep.subr.mxu0 0.0
      %1566 = vmatpush1.msra.mxu0 %v1060
      %1567 = vmatprep.subr.mxu0 0.0
      %1568 = vmatpush1.msra.mxu0 %v1061
      %1569 = vmatprep.subr.mxu0 0.0
      %1570 = vmatpush1.msra.mxu0 0.0
      %1571 = vmatprep.subr.mxu0 0.0
      %1572 = vmatpush1.msra.mxu0 0.0
      %1573 = vmatprep.subr.mxu0 0.0
      %1574 = vmatpush1.msra.mxu0 0.0
      %1575 = vmatprep.subr.mxu0 0.0
      %1576 = vmatpush1.msra.mxu0 0.0
      %1577 = vmatprep.subr.mxu0 0.0
      %1578 = vmatpush1.msra.mxu0 0.0
      %1579 = vmatprep.subr.mxu0 0.0
      %1580 = vmatpush1.msra.mxu0 0.0
      %1581 = vmatprep.subr.mxu0 0.0
      %1582 = vmatpush1.msra.mxu0 0.0
      %1583 = vmatprep.subr.mxu0 0.0
      %1584 = vmatpush1.msra.mxu0 0.0
      %1585 = vmatprep.subr.mxu0 0.0
      %1586 = vmatpush1.msra.mxu0 0.0
      %1587 = vmatprep.subr.mxu0 0.0
      %1588 = vmatpush1.msra.mxu0 0.0
      %1589 = vmatprep.subr.mxu0 0.0
      %1590 = vmatpush1.msra.mxu0 0.0
      %1591 = vmatprep.subr.mxu0 0.0
      %1592 = vmatpush1.msra.mxu0 0.0
      %1593 = vmatprep.subr.mxu0 0.0
      %1594 = vmatpush1.msra.mxu0 0.0
      %1595 = vmatprep.subr.mxu0 0.0
      %1596 = vmatpush1.msra.mxu0 0.0
      %1597 = vmatprep.subr.mxu0 0.0
      %1598 = vmatpush1.msra.mxu0 0.0
      %1599 = vmatprep.subr.mxu0 0.0
      %1600 = vmatpush1.msra.mxu0 0.0
      %1601 = vmatprep.subr.mxu0 0.0
      %1602 = vmatpush1.msra.mxu0 0.0
      %1603 = vmatprep.subr.mxu0 0.0
      %1604 = vmatpush1.msra.mxu0 0.0
      %1605 = vmatprep.subr.mxu0 0.0
      %1606 = vmatpush1.msra.mxu0 0.0
      %1607 = vmatprep.subr.mxu0 0.0
      %1608 = vmatpush1.msra.mxu0 0.0
      %1609 = vmatprep.subr.mxu0 0.0
      %1610 = vmatpush1.msra.mxu0 0.0
      %1611 = vmatprep.subr.mxu0 0.0
      %1612 = vmatpush1.msra.mxu0 0.0
      %1613 = vmatprep.subr.mxu0 0.0
      %1614 = vmatpush1.msra.mxu0 0.0
      %1615 = vmatprep.subr.mxu0 0.0
      %1616 = vmatpush1.msra.mxu0 0.0
      %1617 = vmatprep.subr.mxu0 0.0
      %1618 = vmatpush1.msra.mxu0 0.0
      %1619 = vmatprep.subr.mxu0 0.0
      %1620 = vmatpush1.msra.mxu0 0.0
      %1621 = vmatprep.subr.mxu0 0.0
      %1622 = vmatpush1.msra.mxu0 0.0
      %1623 = vmatprep.subr.mxu0 0.0
      %1624 = vmatpush1.msra.mxu0 0.0
      %1625 = vmatprep.subr.mxu0 0.0
      %1626 = vmatpush1.msra.mxu0 0.0
      %1627 = vmatprep.subr.mxu0 0.0
      %1628 = vmatpush1.msra.mxu0 0.0
      %1629 = vmatprep.mubr.f32.mxu0 0.0
      %1630 = vmatmul.mubr.f32.gmra.mrb[0].mxu0 %v529
      %v1631 = vpop.f32.mrb[0].mxu0
      %v1632 = vadd.f32 0.0, %v1631
      %v1633 = vpop.f32.mrb[0].mxu0
      %1634 = vdwg.mxu0
      %v1636 = vsel %vm1062, %v1632, 0
      %1638 = vmatprep.subr.mxu0 0.0
      %1639 = vmatpush1.msra.mxu0 %v320
      %1640 = vmatprep.subr.mxu0 0.0
      %1641 = vmatpush1.msra.mxu0 %v321
      %1642 = vmatprep.subr.mxu0 0.0
      %1643 = vmatpush1.msra.mxu0 %v322
      %1644 = vmatprep.subr.mxu0 0.0
      %1645 = vmatpush1.msra.mxu0 %v323
      %1646 = vmatprep.subr.mxu0 0.0
      %1647 = vmatpush1.msra.mxu0 %v324
      %1648 = vmatprep.subr.mxu0 0.0
      %1649 = vmatpush1.msra.mxu0 %v325
      %1650 = vmatprep.subr.mxu0 0.0
      %1651 = vmatpush1.msra.mxu0 %v326
      %1652 = vmatprep.subr.mxu0 0.0
      %1653 = vmatpush1.msra.mxu0 %v327
      %1654 = vmatprep.subr.mxu0 0.0
      %1655 = vmatpush1.msra.mxu0 0.0
      %1656 = vmatprep.subr.mxu0 0.0
      %1657 = vmatpush1.msra.mxu0 0.0
      %1658 = vmatprep.subr.mxu0 0.0
      %1659 = vmatpush1.msra.mxu0 0.0
      %1660 = vmatprep.subr.mxu0 0.0
      %1661 = vmatpush1.msra.mxu0 0.0
      %1662 = vmatprep.subr.mxu0 0.0
      %1663 = vmatpush1.msra.mxu0 0.0
      %1664 = vmatprep.subr.mxu0 0.0
      %1665 = vmatpush1.msra.mxu0 0.0
      %1666 = vmatprep.subr.mxu0 0.0
      %1667 = vmatpush1.msra.mxu0 0.0
      %1668 = vmatprep.subr.mxu0 0.0
      %1669 = vmatpush1.msra.mxu0 0.0
      %1670 = vmatprep.subr.mxu0 0.0
      %1671 = vmatpush1.msra.mxu0 0.0
      %1672 = vmatprep.subr.mxu0 0.0
      %1673 = vmatpush1.msra.mxu0 0.0
      %1674 = vmatprep.subr.mxu0 0.0
      %1675 = vmatpush1.msra.mxu0 0.0
      %1676 = vmatprep.subr.mxu0 0.0
      %1677 = vmatpush1.msra.mxu0 0.0
      %1678 = vmatprep.subr.mxu0 0.0
      %1679 = vmatpush1.msra.mxu0 0.0
      %1680 = vmatprep.subr.mxu0 0.0
      %1681 = vmatpush1.msra.mxu0 0.0
      %1682 = vmatprep.subr.mxu0 0.0
      %1683 = vmatpush1.msra.mxu0 0.0
      %1684 = vmatprep.subr.mxu0 0.0
      %1685 = vmatpush1.msra.mxu0 0.0
      %1686 = vmatprep.subr.mxu0 0.0
      %1687 = vmatpush1.msra.mxu0 0.0
      %1688 = vmatprep.subr.mxu0 0.0
      %1689 = vmatpush1.msra.mxu0 0.0
      %1690 = vmatprep.subr.mxu0 0.0
      %1691 = vmatpush1.msra.mxu0 0.0
      %1692 = vmatprep.subr.mxu0 0.0
      %1693 = vmatpush1.msra.mxu0 0.0
      %1694 = vmatprep.subr.mxu0 0.0
      %1695 = vmatpush1.msra.mxu0 0.0
      %1696 = vmatprep.subr.mxu0 0.0
      %1697 = vmatpush1.msra.mxu0 0.0
      %1698 = vmatprep.subr.mxu0 0.0
      %1699 = vmatpush1.msra.mxu0 0.0
      %1700 = vmatprep.subr.mxu0 0.0
      %1701 = vmatpush1.msra.mxu0 0.0
      %1702 = vmatprep.mubr.f32.mxu0 0.0
      %1703 = vmatmul.mubr.f32.gmra.mrb[0].mxu0 %v1636
      %v1704 = vpop.f32.mrb[0].mxu0
      %v1705 = vadd.f32 %v344, %v1704
      %v1706 = vpop.f32.mrb[0].mxu0
      %1707 = vdwg.mxu0
      %vm1708 = vcmask 253952
      %v1709 = vsel %vm1708, %v1705, 0.0
      %1710 = vadd.xlane.f32.xlu0 %v1709
      %v1711 = vpop.xlane.xlu0 %1710
      %v1712 = vrcp.pop 32.0
      %v1713 = vmul.f32 %v1711, %v1712
      %v1714 = vsub.f32 %v1705, %v1713
      %v1715 = vmul.f32 %v1714, %v1714
      %v1716 = vsel %vm1708, %v1715, 0.0
      %1717 = vadd.xlane.f32.xlu0 %v1716
      %v1718 = vpop.xlane.xlu0 %1717
      %v1719 = vmul.f32 %v1718, %v1712
      %v1720 = vadd.f32 %v1719, 1e-05
      %v1721 = vrsqrt.pop %v1720
      %v1722 = vmul.f32 %v1714, %v1721
      %v1723 = vmul.f32 %v1722, %v345
      %v1724 = vadd.f32 %v1723, %v346
      %v1725 = vmul.f32 %v1724, %v353
      %v1726 = vmax.f32 %v1725, 0.0
      %v1728 = vsel %vm712, %v1726, 0
      %1730 = vmatprep.subr.mxu0 0.0
      %1731 = vmatpush1.msra.mxu0 %v328
      %1732 = vmatprep.subr.mxu0 0.0
      %1733 = vmatpush1.msra.mxu0 %v329
      %1734 = vmatprep.subr.mxu0 0.0
      %1735 = vmatpush1.msra.mxu0 %v330
      %1736 = vmatprep.subr.mxu0 0.0
      %1737 = vmatpush1.msra.mxu0 %v331
      %1738 = vmatprep.subr.mxu0 0.0
      %1739 = vmatpush1.msra.mxu0 0.0
      %1740 = vmatprep.subr.mxu0 0.0
      %1741 = vmatpush1.msra.mxu0 0.0
      %1742 = vmatprep.subr.mxu0 0.0
      %1743 = vmatpush1.msra.mxu0 0.0
      %1744 = vmatprep.subr.mxu0 0.0
      %1745 = vmatpush1.msra.mxu0 0.0
      %1746 = vmatprep.subr.mxu0 0.0
      %1747 = vmatpush1.msra.mxu0 0.0
      %1748 = vmatprep.subr.mxu0 0.0
      %1749 = vmatpush1.msra.mxu0 0.0
      %1750 = vmatprep.subr.mxu0 0.0
      %1751 = vmatpush1.msra.mxu0 0.0
      %1752 = vmatprep.subr.mxu0 0.0
      %1753 = vmatpush1.msra.mxu0 0.0
      %1754 = vmatprep.subr.mxu0 0.0
      %1755 = vmatpush1.msra.mxu0 0.0
      %1756 = vmatprep.subr.mxu0 0.0
      %1757 = vmatpush1.msra.mxu0 0.0
      %1758 = vmatprep.subr.mxu0 0.0
      %1759 = vmatpush1.msra.mxu0 0.0
      %1760 = vmatprep.subr.mxu0 0.0
      %1761 = vmatpush1.msra.mxu0 0.0
      %1762 = vmatprep.subr.mxu0 0.0
      %1763 = vmatpush1.msra.mxu0 0.0
      %1764 = vmatprep.subr.mxu0 0.0
      %1765 = vmatpush1.msra.mxu0 0.0
      %1766 = vmatprep.subr.mxu0 0.0
      %1767 = vmatpush1.msra.mxu0 0.0
      %1768 = vmatprep.subr.mxu0 0.0
      %1769 = vmatpush1.msra.mxu0 0.0
      %1770 = vmatprep.subr.mxu0 0.0
      %1771 = vmatpush1.msra.mxu0 0.0
      %1772 = vmatprep.subr.mxu0 0.0
      %1773 = vmatpush1.msra.mxu0 0.0
      %1774 = vmatprep.subr.mxu0 0.0
      %1775 = vmatpush1.msra.mxu0 0.0
      %1776 = vmatprep.subr.mxu0 0.0
      %1777 = vmatpush1.msra.mxu0 0.0
      %1778 = vmatprep.subr.mxu0 0.0
      %1779 = vmatpush1.msra.mxu0 0.0
      %1780 = vmatprep.subr.mxu0 0.0
      %1781 = vmatpush1.msra.mxu0 0.0
      %1782 = vmatprep.subr.mxu0 0.0
      %1783 = vmatpush1.msra.mxu0 0.0
      %1784 = vmatprep.subr.mxu0 0.0
      %1785 = vmatpush1.msra.mxu0 0.0
      %1786 = vmatprep.subr.mxu0 0.0
      %1787 = vmatpush1.msra.mxu0 0.0
      %1788 = vmatprep.subr.mxu0 0.0
      %1789 = vmatpush1.msra.mxu0 0.0
      %1790 = vmatprep.subr.mxu0 0.0
      %1791 = vmatpush1.msra.mxu0 0.0
      %1792 = vmatprep.subr.mxu0 0.0
      %1793 = vmatpush1.msra.mxu0 0.0
      %1794 = vmatprep.mubr.f32.mxu0 0.0
      %1795 = vmatmul.mubr.f32.gmra.mrb[0].mxu0 %v1728
      %v1796 = vpop.f32.mrb[0].mxu0
      %v1797 = vadd.f32 %v347, %v1796
      %v1798 = vpop.f32.mrb[0].mxu0
      %1799 = vdwg.mxu0
      %v1800 = vsel %vm1550, %v1797, 0.0
      %1801 = vadd.xlane.f32.xlu0 %v1800
      %v1802 = vpop.xlane.xlu0 %1801
      %v1803 = vrcp.pop 16.0
      %v1804 = vmul.f32 %v1802, %v1803
      %v1805 = vsub.f32 %v1797, %v1804
      %v1806 = vmul.f32 %v1805, %v1805
      %v1807 = vsel %vm1550, %v1806, 0.0
      %1808 = vadd.xlane.f32.xlu0 %v1807
      %v1809 = vpop.xlane.xlu0 %1808
      %v1810 = vmul.f32 %v1809, %v1803
      %v1811 = vadd.f32 %v1810, 1e-05
      %v1812 = vrsqrt.pop %v1811
      %v1813 = vmul.f32 %v1805, %v1812
      %v1814 = vmul.f32 %v1813, %v348
      %v1815 = vadd.f32 %v1814, %v349
      %v1817 = vlaneseq
      %v1818 = vshrl.u32 %v1817, 7
      %v1819 = vsub.s32 0, %v1818
      %v1820 = vrot.slane %v353, %v1819
      %1821 = vrot.lane.b32.xlu0 %v1820, 96
      %v1822 = vpop.permute.xlu0 %1821
      %v1824 = vmul.f32 %v1815, %v1822
      %v1825 = vmax.f32 %v1824, 0.0
      %v1827 = vsel %vm446, %v1825, 0
      %1829 = vmatprep.subr.mxu0 0.0
      %1830 = vmatpush1.msra.mxu0 %v332
      %1831 = vmatprep.subr.mxu0 0.0
      %1832 = vmatpush1.msra.mxu0 %v333
      %1833 = vmatprep.subr.mxu0 0.0
      %1834 = vmatpush1.msra.mxu0 0.0
      %1835 = vmatprep.subr.mxu0 0.0
      %1836 = vmatpush1.msra.mxu0 0.0
      %1837 = vmatprep.subr.mxu0 0.0
      %1838 = vmatpush1.msra.mxu0 0.0
      %1839 = vmatprep.subr.mxu0 0.0
      %1840 = vmatpush1.msra.mxu0 0.0
      %1841 = vmatprep.subr.mxu0 0.0
      %1842 = vmatpush1.msra.mxu0 0.0
      %1843 = vmatprep.subr.mxu0 0.0
      %1844 = vmatpush1.msra.mxu0 0.0
      %1845 = vmatprep.subr.mxu0 0.0
      %1846 = vmatpush1.msra.mxu0 0.0
      %1847 = vmatprep.subr.mxu0 0.0
      %1848 = vmatpush1.msra.mxu0 0.0
      %1849 = vmatprep.subr.mxu0 0.0
      %1850 = vmatpush1.msra.mxu0 0.0
      %1851 = vmatprep.subr.mxu0 0.0
      %1852 = vmatpush1.msra.mxu0 0.0
      %1853 = vmatprep.subr.mxu0 0.0
      %1854 = vmatpush1.msra.mxu0 0.0
      %1855 = vmatprep.subr.mxu0 0.0
      %1856 = vmatpush1.msra.mxu0 0.0
      %1857 = vmatprep.subr.mxu0 0.0
      %1858 = vmatpush1.msra.mxu0 0.0
      %1859 = vmatprep.subr.mxu0 0.0
      %1860 = vmatpush1.msra.mxu0 0.0
      %1861 = vmatprep.subr.mxu0 0.0
      %1862 = vmatpush1.msra.mxu0 0.0
      %1863 = vmatprep.subr.mxu0 0.0
      %1864 = vmatpush1.msra.mxu0 0.0
      %1865 = vmatprep.subr.mxu0 0.0
      %1866 = vmatpush1.msra.mxu0 0.0
      %1867 = vmatprep.subr.mxu0 0.0
      %1868 = vmatpush1.msra.mxu0 0.0
      %1869 = vmatprep.subr.mxu0 0.0
      %1870 = vmatpush1.msra.mxu0 0.0
      %1871 = vmatprep.subr.mxu0 0.0
      %1872 = vmatpush1.msra.mxu0 0.0
      %1873 = vmatprep.subr.mxu0 0.0
      %1874 = vmatpush1.msra.mxu0 0.0
      %1875 = vmatprep.subr.mxu0 0.0
      %1876 = vmatpush1.msra.mxu0 0.0
      %1877 = vmatprep.subr.mxu0 0.0
      %1878 = vmatpush1.msra.mxu0 0.0
      %1879 = vmatprep.subr.mxu0 0.0
      %1880 = vmatpush1.msra.mxu0 0.0
      %1881 = vmatprep.subr.mxu0 0.0
      %1882 = vmatpush1.msra.mxu0 0.0
      %1883 = vmatprep.subr.mxu0 0.0
      %1884 = vmatpush1.msra.mxu0 0.0
      %1885 = vmatprep.subr.mxu0 0.0
      %1886 = vmatpush1.msra.mxu0 0.0
      %1887 = vmatprep.subr.mxu0 0.0
      %1888 = vmatpush1.msra.mxu0 0.0
      %1889 = vmatprep.subr.mxu0 0.0
      %1890 = vmatpush1.msra.mxu0 0.0
      %1891 = vmatprep.subr.mxu0 0.0
      %1892 = vmatpush1.msra.mxu0 0.0
      %1893 = vmatprep.mubr.f32.mxu0 0.0
      %1894 = vmatmul.mubr.f32.gmra.mrb[0].mxu0 %v1827
      %v1895 = vpop.f32.mrb[0].mxu0
      %v1896 = vadd.f32 %v350, %v1895
      %v1897 = vpop.f32.mrb[0].mxu0
      %1898 = vdwg.mxu0
      %1899 = vst.msk [vmem:[%s303] sm:$0x1] %vm1550, %v1561
      %1900 = vst.msk [vmem:[%s303 + $0x1] sm:$0x1] %vm1550, %v1564
      %1902 = vset.pattern.permute.xlu0 0
      %1903 = vperm.xlu0 %1902, %v1896
      %v1904 = vpop.permute.xlu0 %1903
      %1906 = vst.msk [vmem:[%s303 + $0x2] sm:$0x1] %vm1550, %v1904
      %p1907 = scmp.lt.s32.totalorder %s17, 3
      %s1908 = scalar_select %p1907, %s17, 3
      %s1909 = smul.addr %s1908, 4
      %s1910 = scalar_lea.vmem %s6, %s1909
      // Predicated region
      $region45: #{ac_gcn_forward.1} parent=43 // pred_check
        %p1911 = pneg %p181
      $region46: #{ac_gcn_forward.1} parent=43 // pred_check_branch
        %1913 = sbr.rel (%p1911) target = $region48
      $region47: #{ac_gcn_forward.1} parent=43 // pred_region
        _
      $region48: #{ac_gcn_forward.1} parent=43 // pred_fallthru
        _
    $region44: #{ac_gcn_forward.1} parent=5 // pred_fallthru
      _
    %p1914 = scmp.le.s32.totalorder 2, %s12
    // Predicated region
    $region49: #{ac_gcn_forward.1} parent=5 // pred_check
      %p1915 = pneg %p1914
    $region50: #{ac_gcn_forward.1} parent=5 // pred_check_branch
      %1917 = sbr.rel (%p1915) target = $region52
    $region51: #{ac_gcn_forward.1} parent=5 // pred_region
      %s1918 = ssub.s32 %s12, 2
      // Predicated region
      $region53: #{ac_gcn_forward.1} parent=51 // pred_check
        %p1919 = pneg %p187
      $region54: #{ac_gcn_forward.1} parent=51 // pred_check_branch
        %1921 = sbr.rel (%p1919) target = $region56
      $region55: #{ac_gcn_forward.1} parent=51 // pred_region
        %p1922 = scmp.lt.s32.totalorder %s18, 3
        %s1923 = scalar_select %p1922, %s18, 3
        %s1924 = smul.addr %s1923, 4
        %s1925 = scalar_lea.vmem %s6, %s1924
      $region56: #{ac_gcn_forward.1} parent=51 // pred_fallthru
        _
    $region52: #{ac_gcn_forward.1} parent=5 // pred_fallthru
      _
  $region6: #{ac_gcn_forward.1} parent=0 // loop_footer
    %s16 = sadd.s32 1, %s12
  $region7: #{ac_gcn_forward.1} parent=0 // loop_footer_branch
    %11 = sbr.rel target = $region3
  $region8: #{ac_gcn_forward.1} parent=0 // loop_exit
    _

</llo_original>
